<compile_context>
chip_gen: v5e
topology: v5e:2x2
jax: 0.10.0
libtpu: 0.0.40
codegen_flags: <defaults>
</compile_context>

<pallas_src>
import jax
import jax.numpy as jnp
from jax import lax
from jax.experimental import pallas as pl
from jax.experimental.pallas import tpu as pltpu

INTERNAL_DIM = 768
HIDDEN_DIMS = [256, 128, 32]
OUT_DIM = 2
LN_EPS = 1e-5


def _layernorm(h, gamma, beta):
    """One-pass LayerNorm in f32: var = E[x^2] - mu^2, gamma folded into rsqrt."""
    inv_n = 1.0 / h.shape[-1]
    mu = jnp.sum(h, axis=-1, keepdims=True) * inv_n
    ex2 = jnp.sum(h * h, axis=-1, keepdims=True) * inv_n
    var = jnp.maximum(ex2 - mu * mu, 0.0)
    mult = lax.rsqrt(var + LN_EPS) * gamma
    return (h - mu) * mult + beta


def fovea_kernel(xp_ref, xc_ref,
                 w1a_ref, w1b_ref, b1_ref, g1_ref, be1_ref,
                 w2_ref, b2_ref, g2_ref, be2_ref,
                 w3_ref, b3_ref, g3_ref, be3_ref,
                 w4_ref, b4_ref,
                 o_ref):
    # Block 1: Linear(1536->256) split across the two concat halves.
    # Inputs arrive as f32 tiles (single HBM pass); cast to bf16 in-register for
    # the native MXU path, accumulate in f32.
    xp = xp_ref[...].astype(jnp.bfloat16)
    xc = xc_ref[...].astype(jnp.bfloat16)
    h = jnp.dot(xp, w1a_ref[...], preferred_element_type=jnp.float32)
    h = h + jnp.dot(xc, w1b_ref[...], preferred_element_type=jnp.float32)
    h = h + b1_ref[...]
    h = jnp.maximum(h, 0.0)                      # ReLU (+ Dropout = identity in eval)
    h = _layernorm(h, g1_ref[...], be1_ref[...])

    # Block 2: Linear(256->128) + ReLU + LayerNorm(128)  (bf16 MXU, f32 math)
    h = jnp.dot(h.astype(jnp.bfloat16), w2_ref[...],
                preferred_element_type=jnp.float32) + b2_ref[...]
    h = jnp.maximum(h, 0.0)
    h = _layernorm(h, g2_ref[...], be2_ref[...])

    # Block 3: Linear(128->32) + ReLU + LayerNorm(32)
    h = jnp.dot(h.astype(jnp.bfloat16), w3_ref[...],
                preferred_element_type=jnp.float32) + b3_ref[...]
    h = jnp.maximum(h, 0.0)
    h = _layernorm(h, g3_ref[...], be3_ref[...])

    # Head: Linear(32->2) + Sigmoid
    logits = jnp.dot(h.astype(jnp.bfloat16), w4_ref[...],
                     preferred_element_type=jnp.float32) + b4_ref[...]
    o_ref[...] = jax.nn.sigmoid(logits)


def _choose_tb(batch, block_b):
    """Pick the batch tile: as large as block_b, but ensure >= 2 grid steps whenever
    possible (v7x megacore), 8-sublane aligned for the f32 input tiles."""
    if batch >= 2 * block_b:
        return block_b
    tb = ((max(batch, 2) + 1) // 2 + 7) // 8 * 8   # ~half the batch, rounded up to 8
    return max(8, min(tb, block_b))


def fovea_pos_predictor(peripheral_embedding, cls_token, params, *, block_b=1024):
    """peripheral_embedding, cls_token: [B, 768] f32. Returns [B, 2] float32 in [0, 1]."""
    B = peripheral_embedding.shape[0]
    tb = _choose_tb(B, block_b)
    num_steps = pl.cdiv(B, tb)

    flat = [params["w1a"], params["w1b"], params["b1"], params["g1"], params["be1"],
            params["w2"], params["b2"], params["g2"], params["be2"],
            params["w3"], params["b3"], params["g3"], params["be3"],
            params["w4"], params["b4"]]

    x_map = lambda i: (i, 0)
    const_map = lambda i: (0, 0)      # constant block index -> weights stay VMEM-resident

    # Deeper input buffering only pays off (and is only well-defined) for longer grids.
    deep = num_steps >= 3
    x_mode = pl.Buffered(3) if deep else None
    x_spec = pl.BlockSpec((tb, INTERNAL_DIM), x_map, pipeline_mode=x_mode)
    in_specs = ([x_spec, x_spec]
                + [pl.BlockSpec(a.shape, const_map) for a in flat])
    out_spec = pl.BlockSpec((tb, OUT_DIM), x_map)

    # Explicit VMEM budget: input buffers (f32) + resident params (worst-case double
    # buffered) + in-kernel temporaries + slack.  Keep block_b modest (<~2048) on v7x
    # (64 MiB physical VMEM per TensorCore).
    param_bytes = sum(int(a.size) * a.dtype.itemsize for a in flat)
    nbuf = 3 if deep else 2
    vmem_bytes = (2 * nbuf * tb * INTERNAL_DIM * 4
                  + 2 * param_bytes
                  + tb * (2 * INTERNAL_DIM * 2 + 4 * (256 + 128 + 32 + 16))
                  + (4 << 20))
    vmem_bytes = int(min(vmem_bytes, 128 * 1024 * 1024))

    flops = 2 * B * (2 * INTERNAL_DIM * 256 + 256 * 128 + 128 * 32 + 32 * 2)
    bytes_accessed = (2 * B * INTERNAL_DIM * 4      # f32 inputs, single pass
                      + B * OUT_DIM * 4             # f32 output
                      + param_bytes)
    cost = pl.CostEstimate(flops=flops,
                           transcendentals=B * (OUT_DIM + 3),
                           bytes_accessed=bytes_accessed)

    out = pl.pallas_call(
        fovea_kernel,
        out_shape=jax.ShapeDtypeStruct((B, OUT_DIM), jnp.float32),
        grid=(num_steps,),
        in_specs=in_specs,
        out_specs=out_spec,
        compiler_params=pltpu.CompilerParams(
            dimension_semantics=("parallel",),
            vmem_limit_bytes=vmem_bytes),
        cost_estimate=cost,
    )(peripheral_embedding.astype(jnp.float32),
      cls_token.astype(jnp.float32),
      *flat)
    return out


def init_params(key):
    """Deterministic synthetic init. Linear weights stored pre-transposed as [in, out]
    in bf16 (native MXU operands); biases and LayerNorm params stay f32.
    w1 is split into w1a/w1b (peripheral / cls halves) to avoid a wrapper concat."""
    dims = [2 * INTERNAL_DIM] + HIDDEN_DIMS + [OUT_DIM]   # [1536, 256, 128, 32, 2]
    keys = jax.random.split(key, 2 * (len(dims) - 1))
    p = {}
    for i in range(len(dims) - 1):
        din, dout = dims[i], dims[i + 1]
        scale = 1.0 / jnp.sqrt(jnp.float32(din))
        w = jax.random.uniform(keys[2 * i], (din, dout), jnp.float32, -1.0, 1.0) * scale
        b = jax.random.uniform(keys[2 * i + 1], (1, dout), jnp.float32, -1.0, 1.0) * scale
        if i == 0:
            p["w1a"] = w[:INTERNAL_DIM].astype(jnp.bfloat16)
            p["w1b"] = w[INTERNAL_DIM:].astype(jnp.bfloat16)
            p["b1"] = b
        else:
            p[f"w{i+1}"] = w.astype(jnp.bfloat16)
            p[f"b{i+1}"] = b
    # LayerNorm params (gamma=1, beta=0 as in nn.LayerNorm init).
    for i, hd in enumerate(HIDDEN_DIMS):
        p[f"g{i+1}"] = jnp.ones((1, hd), jnp.float32)
        p[f"be{i+1}"] = jnp.zeros((1, hd), jnp.float32)
    return p


def _reference(peripheral_embedding, cls_token, params):
    """Pure-JAX reference with the same bf16 operands / f32 accumulation."""
    f32 = jnp.float32

    def ln(h, g, b):
        mu = jnp.mean(h, axis=-1, keepdims=True)
        var = jnp.mean((h - mu) ** 2, axis=-1, keepdims=True)
        return (h - mu) / jnp.sqrt(var + LN_EPS) * g + b

    xp = peripheral_embedding.astype(jnp.bfloat16)
    xc = cls_token.astype(jnp.bfloat16)
    h = (jnp.dot(xp, params["w1a"], preferred_element_type=f32)
         + jnp.dot(xc, params["w1b"], preferred_element_type=f32)
         + params["b1"])
    h = ln(jnp.maximum(h, 0.0), params["g1"], params["be1"])
    h = jnp.dot(h.astype(jnp.bfloat16), params["w2"], preferred_element_type=f32) + params["b2"]
    h = ln(jnp.maximum(h, 0.0), params["g2"], params["be2"])
    h = jnp.dot(h.astype(jnp.bfloat16), params["w3"], preferred_element_type=f32) + params["b3"]
    h = ln(jnp.maximum(h, 0.0), params["g3"], params["be3"])
    logits = jnp.dot(h.astype(jnp.bfloat16), params["w4"], preferred_element_type=f32) + params["b4"]
    return jax.nn.sigmoid(logits)


if __name__ == "__main__":
    key = jax.random.PRNGKey(0)
    kp, ke, kc = jax.random.split(key, 3)

    B = 8
    params = init_params(kp)
    peripheral_embedding = jax.random.normal(ke, (B, INTERNAL_DIM), jnp.float32)
    cls_token = jax.random.normal(kc, (B, INTERNAL_DIM), jnp.float32)

    out = fovea_pos_predictor(peripheral_embedding, cls_token, params)
    out = jax.block_until_ready(out)

    assert out.shape == (B, OUT_DIM)
    assert bool(jnp.all(jnp.isfinite(out)))
    assert bool(jnp.all((out >= 0.0) & (out <= 1.0)))

    ref = _reference(peripheral_embedding, cls_token, params)
    assert bool(jnp.all(jnp.abs(out - ref) < 2e-3)), "mismatch vs pure-JAX reference"

    print("KERNEL_OK")
</pallas_src>

<mosaic_0001>
module attributes {stable_mosaic.version = 11 : i64} {
  func.func @fovea_kernel(%arg0: i32, %arg1: memref<8x768xf32, #tpu.memory_space<vmem>>, %arg2: memref<8x768xf32, #tpu.memory_space<vmem>>, %arg3: memref<768x256xbf16, #tpu.memory_space<vmem>>, %arg4: memref<768x256xbf16, #tpu.memory_space<vmem>>, %arg5: memref<1x256xf32, #tpu.memory_space<vmem>>, %arg6: memref<1x256xf32, #tpu.memory_space<vmem>>, %arg7: memref<1x256xf32, #tpu.memory_space<vmem>>, %arg8: memref<256x128xbf16, #tpu.memory_space<vmem>>, %arg9: memref<1x128xf32, #tpu.memory_space<vmem>>, %arg10: memref<1x128xf32, #tpu.memory_space<vmem>>, %arg11: memref<1x128xf32, #tpu.memory_space<vmem>>, %arg12: memref<128x32xbf16, #tpu.memory_space<vmem>>, %arg13: memref<1x32xf32, #tpu.memory_space<vmem>>, %arg14: memref<1x32xf32, #tpu.memory_space<vmem>>, %arg15: memref<1x32xf32, #tpu.memory_space<vmem>>, %arg16: memref<32x2xbf16, #tpu.memory_space<vmem>>, %arg17: memref<1x2xf32, #tpu.memory_space<vmem>>, %arg18: memref<8x2xf32, #tpu.memory_space<vmem>>) attributes {dimension_semantics = [#tpu.dimension_semantics<parallel>], iteration_bounds = array<i64: 1>, scalar_prefetch = 0 : i64, scratch_operands = 0 : i64, tpu.core_type = #tpu.core_type<tc>, window_params = [{transform_indices = @transform_0, window_bounds = array<i64: 8, 768>}, {transform_indices = @transform_1, window_bounds = array<i64: 8, 768>}, {pipeline_mode = #tpu.pipeline_mode<synchronous>, transform_indices = @transform_2, window_bounds = array<i64: 768, 256>}, {pipeline_mode = #tpu.pipeline_mode<synchronous>, transform_indices = @transform_3, window_bounds = array<i64: 768, 256>}, {pipeline_mode = #tpu.pipeline_mode<synchronous>, transform_indices = @transform_4, window_bounds = array<i64: 1, 256>}, {pipeline_mode = #tpu.pipeline_mode<synchronous>, transform_indices = @transform_5, window_bounds = array<i64: 1, 256>}, {pipeline_mode = #tpu.pipeline_mode<synchronous>, transform_indices = @transform_6, window_bounds = array<i64: 1, 256>}, {pipeline_mode = #tpu.pipeline_mode<synchronous>, transform_indices = @transform_7, window_bounds = array<i64: 256, 128>}, {pipeline_mode = #tpu.pipeline_mode<synchronous>, transform_indices = @transform_8, window_bounds = array<i64: 1, 128>}, {pipeline_mode = #tpu.pipeline_mode<synchronous>, transform_indices = @transform_9, window_bounds = array<i64: 1, 128>}, {pipeline_mode = #tpu.pipeline_mode<synchronous>, transform_indices = @transform_10, window_bounds = array<i64: 1, 128>}, {pipeline_mode = #tpu.pipeline_mode<synchronous>, transform_indices = @transform_11, window_bounds = array<i64: 128, 32>}, {pipeline_mode = #tpu.pipeline_mode<synchronous>, transform_indices = @transform_12, window_bounds = array<i64: 1, 32>}, {pipeline_mode = #tpu.pipeline_mode<synchronous>, transform_indices = @transform_13, window_bounds = array<i64: 1, 32>}, {pipeline_mode = #tpu.pipeline_mode<synchronous>, transform_indices = @transform_14, window_bounds = array<i64: 1, 32>}, {pipeline_mode = #tpu.pipeline_mode<synchronous>, transform_indices = @transform_15, window_bounds = array<i64: 32, 2>}, {pipeline_mode = #tpu.pipeline_mode<synchronous>, transform_indices = @transform_16, window_bounds = array<i64: 1, 2>}, {transform_indices = @transform_17, window_bounds = array<i64: 8, 2>}]} {
    %c0 = arith.constant 0 : index
    %c0_0 = arith.constant 0 : index
    %0 = vector.load %arg1[%c0, %c0_0] : memref<8x768xf32, #tpu.memory_space<vmem>>, vector<8x768xf32>
    %1 = arith.truncf %0 : vector<8x768xf32> to vector<8x768xbf16>
    %c0_1 = arith.constant 0 : index
    %c0_2 = arith.constant 0 : index
    %2 = vector.load %arg2[%c0_1, %c0_2] : memref<8x768xf32, #tpu.memory_space<vmem>>, vector<8x768xf32>
    %3 = arith.truncf %2 : vector<8x768xf32> to vector<8x768xbf16>
    %c0_3 = arith.constant 0 : index
    %c0_4 = arith.constant 0 : index
    %4 = vector.load %arg3[%c0_3, %c0_4] : memref<768x256xbf16, #tpu.memory_space<vmem>>, vector<768x256xbf16>
    %cst = arith.constant dense<0.000000e+00> : vector<8x256xf32>
    %5 = tpu.matmul %1, %4, %cst {dimension_numbers = #tpu.dot_dimension_numbers<[1], [0], [0], [1], [0, 0, 1, 1], [], []>} : vector<8x768xbf16>, vector<768x256xbf16>, vector<8x256xf32> -> vector<8x256xf32>
    %c0_5 = arith.constant 0 : index
    %c0_6 = arith.constant 0 : index
    %6 = vector.load %arg4[%c0_5, %c0_6] : memref<768x256xbf16, #tpu.memory_space<vmem>>, vector<768x256xbf16>
    %cst_7 = arith.constant dense<0.000000e+00> : vector<8x256xf32>
    %7 = tpu.matmul %3, %6, %cst_7 {dimension_numbers = #tpu.dot_dimension_numbers<[1], [0], [0], [1], [0, 0, 1, 1], [], []>} : vector<8x768xbf16>, vector<768x256xbf16>, vector<8x256xf32> -> vector<8x256xf32>
    %8 = arith.addf %5, %7 : vector<8x256xf32>
    %c0_8 = arith.constant 0 : index
    %c0_9 = arith.constant 0 : index
    %9 = vector.load %arg5[%c0_8, %c0_9] : memref<1x256xf32, #tpu.memory_space<vmem>>, vector<1x256xf32>
    %10 = vector.broadcast %9 : vector<1x256xf32> to vector<8x256xf32>
    %11 = arith.addf %8, %10 : vector<8x256xf32>
    %cst_10 = arith.constant 0.000000e+00 : f32
    %12 = vector.broadcast %cst_10 : f32 to vector<8x256xf32>
    %13 = arith.maximumf %11, %12 : vector<8x256xf32>
    %c0_11 = arith.constant 0 : index
    %c0_12 = arith.constant 0 : index
    %14 = vector.load %arg6[%c0_11, %c0_12] : memref<1x256xf32, #tpu.memory_space<vmem>>, vector<1x256xf32>
    %c0_13 = arith.constant 0 : index
    %c0_14 = arith.constant 0 : index
    %15 = vector.load %arg7[%c0_13, %c0_14] : memref<1x256xf32, #tpu.memory_space<vmem>>, vector<1x256xf32>
    %cst_15 = arith.constant dense<0.000000e+00> : vector<8xf32>
    %16 = vector.multi_reduction <add>, %13, %cst_15 [1] : vector<8x256xf32> to vector<8xf32>
    %17 = vector.shape_cast %16 : vector<8xf32> to vector<8x1xf32>
    %cst_16 = arith.constant 3.906250e-03 : f32
    %18 = vector.broadcast %cst_16 : f32 to vector<8x1xf32>
    %19 = arith.mulf %17, %18 : vector<8x1xf32>
    %20 = arith.mulf %13, %13 : vector<8x256xf32>
    %cst_17 = arith.constant dense<0.000000e+00> : vector<8xf32>
    %21 = vector.multi_reduction <add>, %20, %cst_17 [1] : vector<8x256xf32> to vector<8xf32>
    %22 = vector.shape_cast %21 : vector<8xf32> to vector<8x1xf32>
    %cst_18 = arith.constant 3.906250e-03 : f32
    %23 = vector.broadcast %cst_18 : f32 to vector<8x1xf32>
    %24 = arith.mulf %22, %23 : vector<8x1xf32>
    %25 = arith.mulf %19, %19 : vector<8x1xf32>
    %26 = arith.subf %24, %25 : vector<8x1xf32>
    %cst_19 = arith.constant 0.000000e+00 : f32
    %27 = vector.broadcast %cst_19 : f32 to vector<8x1xf32>
    %28 = arith.maximumf %26, %27 : vector<8x1xf32>
    %cst_20 = arith.constant 9.99999974E-6 : f32
    %29 = vector.broadcast %cst_20 : f32 to vector<8x1xf32>
    %30 = arith.addf %28, %29 : vector<8x1xf32>
    %31 = math.rsqrt %30 : vector<8x1xf32>
    %32 = vector.broadcast %31 : vector<8x1xf32> to vector<8x256xf32>
    %33 = vector.broadcast %14 : vector<1x256xf32> to vector<8x256xf32>
    %34 = arith.mulf %32, %33 : vector<8x256xf32>
    %35 = vector.broadcast %19 : vector<8x1xf32> to vector<8x256xf32>
    %36 = arith.subf %13, %35 : vector<8x256xf32>
    %37 = arith.mulf %36, %34 : vector<8x256xf32>
    %38 = vector.broadcast %15 : vector<1x256xf32> to vector<8x256xf32>
    %39 = arith.addf %37, %38 : vector<8x256xf32>
    %40 = arith.truncf %39 : vector<8x256xf32> to vector<8x256xbf16>
    %c0_21 = arith.constant 0 : index
    %c0_22 = arith.constant 0 : index
    %41 = vector.load %arg8[%c0_21, %c0_22] : memref<256x128xbf16, #tpu.memory_space<vmem>>, vector<256x128xbf16>
    %cst_23 = arith.constant dense<0.000000e+00> : vector<8x128xf32>
    %42 = tpu.matmul %40, %41, %cst_23 {dimension_numbers = #tpu.dot_dimension_numbers<[1], [0], [0], [1], [0, 0, 1, 1], [], []>} : vector<8x256xbf16>, vector<256x128xbf16>, vector<8x128xf32> -> vector<8x128xf32>
    %c0_24 = arith.constant 0 : index
    %c0_25 = arith.constant 0 : index
    %43 = vector.load %arg9[%c0_24, %c0_25] : memref<1x128xf32, #tpu.memory_space<vmem>>, vector<1x128xf32>
    %44 = vector.broadcast %43 : vector<1x128xf32> to vector<8x128xf32>
    %45 = arith.addf %42, %44 : vector<8x128xf32>
    %cst_26 = arith.constant 0.000000e+00 : f32
    %46 = vector.broadcast %cst_26 : f32 to vector<8x128xf32>
    %47 = arith.maximumf %45, %46 : vector<8x128xf32>
    %c0_27 = arith.constant 0 : index
    %c0_28 = arith.constant 0 : index
    %48 = vector.load %arg10[%c0_27, %c0_28] : memref<1x128xf32, #tpu.memory_space<vmem>>, vector<1x128xf32>
    %c0_29 = arith.constant 0 : index
    %c0_30 = arith.constant 0 : index
    %49 = vector.load %arg11[%c0_29, %c0_30] : memref<1x128xf32, #tpu.memory_space<vmem>>, vector<1x128xf32>
    %cst_31 = arith.constant dense<0.000000e+00> : vector<8xf32>
    %50 = vector.multi_reduction <add>, %47, %cst_31 [1] : vector<8x128xf32> to vector<8xf32>
    %51 = vector.shape_cast %50 : vector<8xf32> to vector<8x1xf32>
    %cst_32 = arith.constant 7.812500e-03 : f32
    %52 = vector.broadcast %cst_32 : f32 to vector<8x1xf32>
    %53 = arith.mulf %51, %52 : vector<8x1xf32>
    %54 = arith.mulf %47, %47 : vector<8x128xf32>
    %cst_33 = arith.constant dense<0.000000e+00> : vector<8xf32>
    %55 = vector.multi_reduction <add>, %54, %cst_33 [1] : vector<8x128xf32> to vector<8xf32>
    %56 = vector.shape_cast %55 : vector<8xf32> to vector<8x1xf32>
    %cst_34 = arith.constant 7.812500e-03 : f32
    %57 = vector.broadcast %cst_34 : f32 to vector<8x1xf32>
    %58 = arith.mulf %56, %57 : vector<8x1xf32>
    %59 = arith.mulf %53, %53 : vector<8x1xf32>
    %60 = arith.subf %58, %59 : vector<8x1xf32>
    %cst_35 = arith.constant 0.000000e+00 : f32
    %61 = vector.broadcast %cst_35 : f32 to vector<8x1xf32>
    %62 = arith.maximumf %60, %61 : vector<8x1xf32>
    %cst_36 = arith.constant 9.99999974E-6 : f32
    %63 = vector.broadcast %cst_36 : f32 to vector<8x1xf32>
    %64 = arith.addf %62, %63 : vector<8x1xf32>
    %65 = math.rsqrt %64 : vector<8x1xf32>
    %66 = vector.broadcast %65 : vector<8x1xf32> to vector<8x128xf32>
    %67 = vector.broadcast %48 : vector<1x128xf32> to vector<8x128xf32>
    %68 = arith.mulf %66, %67 : vector<8x128xf32>
    %69 = vector.broadcast %53 : vector<8x1xf32> to vector<8x128xf32>
    %70 = arith.subf %47, %69 : vector<8x128xf32>
    %71 = arith.mulf %70, %68 : vector<8x128xf32>
    %72 = vector.broadcast %49 : vector<1x128xf32> to vector<8x128xf32>
    %73 = arith.addf %71, %72 : vector<8x128xf32>
    %74 = arith.truncf %73 : vector<8x128xf32> to vector<8x128xbf16>
    %c0_37 = arith.constant 0 : index
    %c0_38 = arith.constant 0 : index
    %75 = vector.load %arg12[%c0_37, %c0_38] : memref<128x32xbf16, #tpu.memory_space<vmem>>, vector<128x32xbf16>
    %cst_39 = arith.constant dense<0.000000e+00> : vector<8x32xf32>
    %76 = tpu.matmul %74, %75, %cst_39 {dimension_numbers = #tpu.dot_dimension_numbers<[1], [0], [0], [1], [0, 0, 1, 1], [], []>} : vector<8x128xbf16>, vector<128x32xbf16>, vector<8x32xf32> -> vector<8x32xf32>
    %c0_40 = arith.constant 0 : index
    %c0_41 = arith.constant 0 : index
    %77 = vector.load %arg13[%c0_40, %c0_41] : memref<1x32xf32, #tpu.memory_space<vmem>>, vector<1x32xf32>
    %78 = vector.broadcast %77 : vector<1x32xf32> to vector<8x32xf32>
    %79 = arith.addf %76, %78 : vector<8x32xf32>
    %cst_42 = arith.constant 0.000000e+00 : f32
    %80 = vector.broadcast %cst_42 : f32 to vector<8x32xf32>
    %81 = arith.maximumf %79, %80 : vector<8x32xf32>
    %c0_43 = arith.constant 0 : index
    %c0_44 = arith.constant 0 : index
    %82 = vector.load %arg14[%c0_43, %c0_44] : memref<1x32xf32, #tpu.memory_space<vmem>>, vector<1x32xf32>
    %c0_45 = arith.constant 0 : index
    %c0_46 = arith.constant 0 : index
    %83 = vector.load %arg15[%c0_45, %c0_46] : memref<1x32xf32, #tpu.memory_space<vmem>>, vector<1x32xf32>
    %cst_47 = arith.constant dense<0.000000e+00> : vector<8xf32>
    %84 = vector.multi_reduction <add>, %81, %cst_47 [1] : vector<8x32xf32> to vector<8xf32>
    %85 = vector.shape_cast %84 : vector<8xf32> to vector<8x1xf32>
    %cst_48 = arith.constant 3.125000e-02 : f32
    %86 = vector.broadcast %cst_48 : f32 to vector<8x1xf32>
    %87 = arith.mulf %85, %86 : vector<8x1xf32>
    %88 = arith.mulf %81, %81 : vector<8x32xf32>
    %cst_49 = arith.constant dense<0.000000e+00> : vector<8xf32>
    %89 = vector.multi_reduction <add>, %88, %cst_49 [1] : vector<8x32xf32> to vector<8xf32>
    %90 = vector.shape_cast %89 : vector<8xf32> to vector<8x1xf32>
    %cst_50 = arith.constant 3.125000e-02 : f32
    %91 = vector.broadcast %cst_50 : f32 to vector<8x1xf32>
    %92 = arith.mulf %90, %91 : vector<8x1xf32>
    %93 = arith.mulf %87, %87 : vector<8x1xf32>
    %94 = arith.subf %92, %93 : vector<8x1xf32>
    %cst_51 = arith.constant 0.000000e+00 : f32
    %95 = vector.broadcast %cst_51 : f32 to vector<8x1xf32>
    %96 = arith.maximumf %94, %95 : vector<8x1xf32>
    %cst_52 = arith.constant 9.99999974E-6 : f32
    %97 = vector.broadcast %cst_52 : f32 to vector<8x1xf32>
    %98 = arith.addf %96, %97 : vector<8x1xf32>
    %99 = math.rsqrt %98 : vector<8x1xf32>
    %100 = vector.broadcast %99 : vector<8x1xf32> to vector<8x32xf32>
    %101 = vector.broadcast %82 : vector<1x32xf32> to vector<8x32xf32>
    %102 = arith.mulf %100, %101 : vector<8x32xf32>
    %103 = vector.broadcast %87 : vector<8x1xf32> to vector<8x32xf32>
    %104 = arith.subf %81, %103 : vector<8x32xf32>
    %105 = arith.mulf %104, %102 : vector<8x32xf32>
    %106 = vector.broadcast %83 : vector<1x32xf32> to vector<8x32xf32>
    %107 = arith.addf %105, %106 : vector<8x32xf32>
    %108 = arith.truncf %107 : vector<8x32xf32> to vector<8x32xbf16>
    %c0_53 = arith.constant 0 : index
    %c0_54 = arith.constant 0 : index
    %109 = vector.load %arg16[%c0_53, %c0_54] : memref<32x2xbf16, #tpu.memory_space<vmem>>, vector<32x2xbf16>
    %cst_55 = arith.constant dense<0.000000e+00> : vector<8x2xf32>
    %110 = tpu.matmul %108, %109, %cst_55 {dimension_numbers = #tpu.dot_dimension_numbers<[1], [0], [0], [1], [0, 0, 1, 1], [], []>} : vector<8x32xbf16>, vector<32x2xbf16>, vector<8x2xf32> -> vector<8x2xf32>
    %c0_56 = arith.constant 0 : index
    %c0_57 = arith.constant 0 : index
    %111 = vector.load %arg17[%c0_56, %c0_57] : memref<1x2xf32, #tpu.memory_space<vmem>>, vector<1x2xf32>
    %112 = vector.broadcast %111 : vector<1x2xf32> to vector<8x2xf32>
    %113 = arith.addf %110, %112 : vector<8x2xf32>
    %114 = arith.negf %113 : vector<8x2xf32>
    %115 = math.exp %114 : vector<8x2xf32>
    %cst_58 = arith.constant 1.000000e+00 : f32
    %116 = vector.broadcast %cst_58 : f32 to vector<8x2xf32>
    %117 = arith.addf %116, %115 : vector<8x2xf32>
    %118 = arith.divf %116, %117 : vector<8x2xf32>
    %c0_59 = arith.constant 0 : index
    %c0_60 = arith.constant 0 : index
    %119 = vector.load %arg18[%c0_59, %c0_60] : memref<8x2xf32, #tpu.memory_space<vmem>>, vector<8x2xf32>
    tpu.vector_store %arg18[%c0_59, %c0_60], %118 {strides = array<i32>} : memref<8x2xf32, #tpu.memory_space<vmem>>, vector<8x2xf32>,
    return
  }
  func.func @transform_0(%arg0: i32) -> (i32, i32) {
    %c0_i32 = arith.constant 0 : i32
    %c0_i32_0 = arith.constant 0 : i32
    return %arg0, %c0_i32 : i32, i32
  }
  func.func @transform_1(%arg0: i32) -> (i32, i32) {
    %c0_i32 = arith.constant 0 : i32
    %c0_i32_0 = arith.constant 0 : i32
    return %arg0, %c0_i32 : i32, i32
  }
  func.func @transform_2(%arg0: i32) -> (i32, i32) {
    %c0_i32 = arith.constant 0 : i32
    %c0_i32_0 = arith.constant 0 : i32
    %c0_i32_1 = arith.constant 0 : i32
    return %c0_i32, %c0_i32_0 : i32, i32
  }
  func.func @transform_3(%arg0: i32) -> (i32, i32) {
    %c0_i32 = arith.constant 0 : i32
    %c0_i32_0 = arith.constant 0 : i32
    %c0_i32_1 = arith.constant 0 : i32
    return %c0_i32, %c0_i32_0 : i32, i32
  }
  func.func @transform_4(%arg0: i32) -> (i32, i32) {
    %c0_i32 = arith.constant 0 : i32
    %c0_i32_0 = arith.constant 0 : i32
    %c0_i32_1 = arith.constant 0 : i32
    return %c0_i32, %c0_i32_0 : i32, i32
  }
  func.func @transform_5(%arg0: i32) -> (i32, i32) {
    %c0_i32 = arith.constant 0 : i32
    %c0_i32_0 = arith.constant 0 : i32
    %c0_i32_1 = arith.constant 0 : i32
    return %c0_i32, %c0_i32_0 : i32, i32
  }
  func.func @transform_6(%arg0: i32) -> (i32, i32) {
    %c0_i32 = arith.constant 0 : i32
    %c0_i32_0 = arith.constant 0 : i32
    %c0_i32_1 = arith.constant 0 : i32
    return %c0_i32, %c0_i32_0 : i32, i32
  }
  func.func @transform_7(%arg0: i32) -> (i32, i32) {
    %c0_i32 = arith.constant 0 : i32
    %c0_i32_0 = arith.constant 0 : i32
    %c0_i32_1 = arith.constant 0 : i32
    return %c0_i32, %c0_i32_0 : i32, i32
  }
  func.func @transform_8(%arg0: i32) -> (i32, i32) {
    %c0_i32 = arith.constant 0 : i32
    %c0_i32_0 = arith.constant 0 : i32
    %c0_i32_1 = arith.constant 0 : i32
    return %c0_i32, %c0_i32_0 : i32, i32
  }
  func.func @transform_9(%arg0: i32) -> (i32, i32) {
    %c0_i32 = arith.constant 0 : i32
    %c0_i32_0 = arith.constant 0 : i32
    %c0_i32_1 = arith.constant 0 : i32
    return %c0_i32, %c0_i32_0 : i32, i32
  }
  func.func @transform_10(%arg0: i32) -> (i32, i32) {
    %c0_i32 = arith.constant 0 : i32
    %c0_i32_0 = arith.constant 0 : i32
    %c0_i32_1 = arith.constant 0 : i32
    return %c0_i32, %c0_i32_0 : i32, i32
  }
  func.func @transform_11(%arg0: i32) -> (i32, i32) {
    %c0_i32 = arith.constant 0 : i32
    %c0_i32_0 = arith.constant 0 : i32
    %c0_i32_1 = arith.constant 0 : i32
    return %c0_i32, %c0_i32_0 : i32, i32
  }
  func.func @transform_12(%arg0: i32) -> (i32, i32) {
    %c0_i32 = arith.constant 0 : i32
    %c0_i32_0 = arith.constant 0 : i32
    %c0_i32_1 = arith.constant 0 : i32
    return %c0_i32, %c0_i32_0 : i32, i32
  }
  func.func @transform_13(%arg0: i32) -> (i32, i32) {
    %c0_i32 = arith.constant 0 : i32
    %c0_i32_0 = arith.constant 0 : i32
    %c0_i32_1 = arith.constant 0 : i32
    return %c0_i32, %c0_i32_0 : i32, i32
  }
  func.func @transform_14(%arg0: i32) -> (i32, i32) {
    %c0_i32 = arith.constant 0 : i32
    %c0_i32_0 = arith.constant 0 : i32
    %c0_i32_1 = arith.constant 0 : i32
    return %c0_i32, %c0_i32_0 : i32, i32
  }
  func.func @transform_15(%arg0: i32) -> (i32, i32) {
    %c0_i32 = arith.constant 0 : i32
    %c0_i32_0 = arith.constant 0 : i32
    %c0_i32_1 = arith.constant 0 : i32
    return %c0_i32, %c0_i32_0 : i32, i32
  }
  func.func @transform_16(%arg0: i32) -> (i32, i32) {
    %c0_i32 = arith.constant 0 : i32
    %c0_i32_0 = arith.constant 0 : i32
    %c0_i32_1 = arith.constant 0 : i32
    return %c0_i32, %c0_i32_0 : i32, i32
  }
  func.func @transform_17(%arg0: i32) -> (i32, i32) {
    %c0_i32 = arith.constant 0 : i32
    %c0_i32_0 = arith.constant 0 : i32
    return %arg0, %c0_i32 : i32, i32
  }
}

</mosaic_0001>

<llo_original>
// kernel: tpu_custom_call.1
$region0: #{tpu_custom_call.1}
  #allocation0 [shape = 'u32[]', space=smem, size = 0x4, offset = 0x4, fixed_abs, tag = 'smem constant byte address 0x4 - core index']
  #allocation1 [shape = 'u32[72,128]{1,0:T(1,128)}', space=vmem, size = 0x9000, scoped, tag = 'internal scratch']
  %s0 = inlined_call_operand.vmem [shape: f32[8,768], index: 0, kind: input, shape index: {}]
  %s1 = inlined_call_operand.vmem [shape: f32[8,768], index: 1, kind: input, shape index: {}]
  %s2 = inlined_call_operand.hbm [shape: bf16[768,256], index: 2, kind: input, shape index: {}]
  %s3 = inlined_call_operand.hbm [shape: bf16[768,256], index: 3, kind: input, shape index: {}]
  %s4 = inlined_call_operand.vmem [shape: f32[1,256], index: 4, kind: input, shape index: {}]
  %s5 = inlined_call_operand.vmem [shape: f32[1,256], index: 5, kind: input, shape index: {}]
  %s6 = inlined_call_operand.vmem [shape: f32[1,256], index: 6, kind: input, shape index: {}]
  %s7 = inlined_call_operand.hbm [shape: bf16[256,128], index: 7, kind: input, shape index: {}]
  %s8 = inlined_call_operand.vmem [shape: f32[1,128], index: 8, kind: input, shape index: {}]
  %s9 = inlined_call_operand.vmem [shape: f32[1,128], index: 9, kind: input, shape index: {}]
  %s10 = inlined_call_operand.vmem [shape: f32[1,128], index: 10, kind: input, shape index: {}]
  %s11 = inlined_call_operand.vmem [shape: bf16[128,32], index: 11, kind: input, shape index: {}]
  %s12 = inlined_call_operand.vmem [shape: f32[1,32], index: 12, kind: input, shape index: {}]
  %s13 = inlined_call_operand.vmem [shape: f32[1,32], index: 13, kind: input, shape index: {}]
  %s14 = inlined_call_operand.vmem [shape: f32[1,32], index: 14, kind: input, shape index: {}]
  %s15 = inlined_call_operand.vmem [shape: bf16[32,2], index: 15, kind: input, shape index: {}]
  %s16 = inlined_call_operand.vmem [shape: f32[1,2], index: 16, kind: input, shape index: {}]
  %s17 = inlined_call_operand.vmem [shape: f32[8,2], index: 17, kind: output, shape index: {}]
  %s18 = sld [smem:[#allocation0]]
  $region90: #{tpu_custom_call.1} parent=0
    _
  %s20 = ssub.s32 1, %s18
  %s21 = scalar_select 0, %s20, %s18
  $region1: #{tpu_custom_call.1} parent=0
    #allocation2 [shape = 'u8[393216]{0}', space=vmem, size = 0x60000, scoped, tag = 'input window, operand 2, single buffered']
    #allocation3 [shape = 's32[1]{0}', space=sflag, size = 0x4, scoped, tag = 'scoped memory for tpu_custom_call.1']
    #allocation4 [shape = 'u8[393216]{0}', space=vmem, size = 0x60000, scoped, tag = 'input window, operand 3, single buffered']
    #allocation5 [shape = 's32[1]{0}', space=sflag, size = 0x4, scoped, tag = 'scoped memory for tpu_custom_call.1']
    #allocation6 [shape = 'u8[65536]{0}', space=vmem, size = 0x10000, scoped, tag = 'input window, operand 7, single buffered']
    %22 = vsyncpa [#allocation3], 0
    %23 = vsyncpa [#allocation5], 0
    // Predicated region
    $region2: #{tpu_custom_call.1} parent=1 // pred_check
      _
    $region3: #{tpu_custom_call.1} parent=1 // pred_check_branch
      %25 = sbr.rel (0) target = $region5
    $region4: #{tpu_custom_call.1} parent=1 // pred_region
      _
    $region5: #{tpu_custom_call.1} parent=1 // pred_fallthru
      _
    // Predicated region
    $region6: #{tpu_custom_call.1} parent=1 // pred_check
      _
    $region7: #{tpu_custom_call.1} parent=1 // pred_check_branch
      %27 = sbr.rel (0) target = $region9
    $region8: #{tpu_custom_call.1} parent=1 // pred_region
      _
    $region9: #{tpu_custom_call.1} parent=1 // pred_fallthru
      _
    // Predicated region
    $region10: #{tpu_custom_call.1} parent=1 // pred_check
      _
    $region11: #{tpu_custom_call.1} parent=1 // pred_check_branch
      %29 = sbr.rel (0) target = $region13
    $region12: #{tpu_custom_call.1} parent=1 // pred_region
      %31 = vsyncadd [#allocation3], 0
      %s32 = sshll.u32 %s2, 4
      %s33 = int_to_ptr.hbm [resolvable:$true] %s32
      %s34 = sshll.u32 [#allocation2], 4
      %s35 = int_to_ptr.vmem [resolvable:$true] %s34
      %40 = dma.hbm_to_vmem [thread:$0]  %s33, 12288, %s35, [#allocation3], 128, 128, 8
    $region13: #{tpu_custom_call.1} parent=1 // pred_fallthru
      _
    // Predicated region
    $region14: #{tpu_custom_call.1} parent=1 // pred_check
      _
    $region15: #{tpu_custom_call.1} parent=1 // pred_check_branch
      %42 = sbr.rel (0) target = $region17
    $region16: #{tpu_custom_call.1} parent=1 // pred_region
      %44 = vsyncadd [#allocation5], 0
      %s45 = sshll.u32 %s3, 4
      %s46 = int_to_ptr.hbm [resolvable:$true] %s45
      %s47 = sshll.u32 [#allocation4], 4
      %s48 = int_to_ptr.vmem [resolvable:$true] %s47
      %53 = dma.hbm_to_vmem [thread:$0]  %s46, 12288, %s48, [#allocation5], 128, 128, 8
    $region17: #{tpu_custom_call.1} parent=1 // pred_fallthru
      _
    // Predicated region
    $region18: #{tpu_custom_call.1} parent=1 // pred_check
      _
    $region19: #{tpu_custom_call.1} parent=1 // pred_check_branch
      %55 = sbr.rel (0) target = $region21
    $region20: #{tpu_custom_call.1} parent=1 // pred_region
      _
    $region21: #{tpu_custom_call.1} parent=1 // pred_fallthru
      _
    // Predicated region
    $region22: #{tpu_custom_call.1} parent=1 // pred_check
      _
    $region23: #{tpu_custom_call.1} parent=1 // pred_check_branch
      %57 = sbr.rel (0) target = $region25
    $region24: #{tpu_custom_call.1} parent=1 // pred_region
      _
    $region25: #{tpu_custom_call.1} parent=1 // pred_fallthru
      _
    // Predicated region
    $region26: #{tpu_custom_call.1} parent=1 // pred_check
      _
    $region27: #{tpu_custom_call.1} parent=1 // pred_check_branch
      %59 = sbr.rel (0) target = $region29
    $region28: #{tpu_custom_call.1} parent=1 // pred_region
      _
    $region29: #{tpu_custom_call.1} parent=1 // pred_fallthru
      _
    // Predicated region
    $region30: #{tpu_custom_call.1} parent=1 // pred_check
      _
    $region31: #{tpu_custom_call.1} parent=1 // pred_check_branch
      %61 = sbr.rel (0) target = $region33
    $region32: #{tpu_custom_call.1} parent=1 // pred_region
      %63 = vsyncadd [#allocation5], 0
      %s64 = sshll.u32 %s7, 4
      %s65 = int_to_ptr.hbm [resolvable:$true] %s64
      %s66 = sshll.u32 [#allocation6], 4
      %s67 = int_to_ptr.vmem [resolvable:$true] %s66
      %72 = dma.hbm_to_vmem [thread:$0]  %s65, 2048, %s67, [#allocation5], 64, 64, 4
    $region33: #{tpu_custom_call.1} parent=1 // pred_fallthru
      _
    // Predicated region
    $region34: #{tpu_custom_call.1} parent=1 // pred_check
      _
    $region35: #{tpu_custom_call.1} parent=1 // pred_check_branch
      %74 = sbr.rel (0) target = $region37
    $region36: #{tpu_custom_call.1} parent=1 // pred_region
      _
    $region37: #{tpu_custom_call.1} parent=1 // pred_fallthru
      _
    // Predicated region
    $region38: #{tpu_custom_call.1} parent=1 // pred_check
      _
    $region39: #{tpu_custom_call.1} parent=1 // pred_check_branch
      %76 = sbr.rel (0) target = $region41
    $region40: #{tpu_custom_call.1} parent=1 // pred_region
      _
    $region41: #{tpu_custom_call.1} parent=1 // pred_fallthru
      _
    // Predicated region
    $region42: #{tpu_custom_call.1} parent=1 // pred_check
      _
    $region43: #{tpu_custom_call.1} parent=1 // pred_check_branch
      %78 = sbr.rel (0) target = $region45
    $region44: #{tpu_custom_call.1} parent=1 // pred_region
      _
    $region45: #{tpu_custom_call.1} parent=1 // pred_fallthru
      _
    // Predicated region
    $region46: #{tpu_custom_call.1} parent=1 // pred_check
      _
    $region47: #{tpu_custom_call.1} parent=1 // pred_check_branch
      %80 = sbr.rel (0) target = $region49
    $region48: #{tpu_custom_call.1} parent=1 // pred_region
      _
    $region49: #{tpu_custom_call.1} parent=1 // pred_fallthru
      _
    // Predicated region
    $region50: #{tpu_custom_call.1} parent=1 // pred_check
      _
    $region51: #{tpu_custom_call.1} parent=1 // pred_check_branch
      %82 = sbr.rel (0) target = $region53
    $region52: #{tpu_custom_call.1} parent=1 // pred_region
      _
    $region53: #{tpu_custom_call.1} parent=1 // pred_fallthru
      _
    // Predicated region
    $region54: #{tpu_custom_call.1} parent=1 // pred_check
      _
    $region55: #{tpu_custom_call.1} parent=1 // pred_check_branch
      %84 = sbr.rel (0) target = $region57
    $region56: #{tpu_custom_call.1} parent=1 // pred_region
      _
    $region57: #{tpu_custom_call.1} parent=1 // pred_fallthru
      _
    // Predicated region
    $region58: #{tpu_custom_call.1} parent=1 // pred_check
      _
    $region59: #{tpu_custom_call.1} parent=1 // pred_check_branch
      %86 = sbr.rel (0) target = $region61
    $region60: #{tpu_custom_call.1} parent=1 // pred_region
      _
    $region61: #{tpu_custom_call.1} parent=1 // pred_fallthru
      _
    // Predicated region
    $region62: #{tpu_custom_call.1} parent=1 // pred_check
      _
    $region63: #{tpu_custom_call.1} parent=1 // pred_check_branch
      %88 = sbr.rel (0) target = $region65
    $region64: #{tpu_custom_call.1} parent=1 // pred_region
      _
    $region65: #{tpu_custom_call.1} parent=1 // pred_fallthru
      _
    // Predicated region
    $region66: #{tpu_custom_call.1} parent=1 // pred_check
      _
    $region67: #{tpu_custom_call.1} parent=1 // pred_check_branch
      %90 = sbr.rel (0) target = $region69
    $region68: #{tpu_custom_call.1} parent=1 // pred_region
      _
    $region69: #{tpu_custom_call.1} parent=1 // pred_fallthru
      _
    // Predicated region
    $region70: #{tpu_custom_call.1} parent=1 // pred_check
      _
    $region71: #{tpu_custom_call.1} parent=1 // pred_check_branch
      %92 = sbr.rel (0) target = $region73
    $region72: #{tpu_custom_call.1} parent=1 // pred_region
      %94 = dma.done [#allocation3], 12288
    $region73: #{tpu_custom_call.1} parent=1 // pred_fallthru
      _
    // Predicated region
    $region74: #{tpu_custom_call.1} parent=1 // pred_check
      _
    $region75: #{tpu_custom_call.1} parent=1 // pred_check_branch
      %96 = sbr.rel (0) target = $region77
    $region76: #{tpu_custom_call.1} parent=1 // pred_region
      %98 = dma.done [#allocation5], 12288
    $region77: #{tpu_custom_call.1} parent=1 // pred_fallthru
      _
    // Predicated region
    $region78: #{tpu_custom_call.1} parent=1 // pred_check
      _
    $region79: #{tpu_custom_call.1} parent=1 // pred_check_branch
      %100 = sbr.rel (0) target = $region81
    $region80: #{tpu_custom_call.1} parent=1 // pred_region
      %102 = dma.done [#allocation5], 2048
    $region81: #{tpu_custom_call.1} parent=1 // pred_fallthru
      _
    %v104 = vld [vmem:[%s0] sm:$0xff]
    %v105 = vld [vmem:[%s0 + $0x8] sm:$0xff]
    %v106 = vld [vmem:[%s0 + $0x10] sm:$0xff]
    %v107 = vld [vmem:[%s0 + $0x18] sm:$0xff]
    %v108 = vld [vmem:[%s0 + $0x20] sm:$0xff]
    %v109 = vld [vmem:[%s0 + $0x28] sm:$0xff]
    %v110 = vpack.c.bf16 %v104, %v104
    %v111 = vpack.c.bf16 %v105, %v105
    %v112 = vpack.c.bf16 %v106, %v106
    %v113 = vpack.c.bf16 %v107, %v107
    %v114 = vpack.c.bf16 %v108, %v108
    %v115 = vpack.c.bf16 %v109, %v109
    %v116 = vld [vmem:[%s1] sm:$0xff]
    %v117 = vld [vmem:[%s1 + $0x8] sm:$0xff]
    %v118 = vld [vmem:[%s1 + $0x10] sm:$0xff]
    %v119 = vld [vmem:[%s1 + $0x18] sm:$0xff]
    %v120 = vld [vmem:[%s1 + $0x20] sm:$0xff]
    %v121 = vld [vmem:[%s1 + $0x28] sm:$0xff]
    %v122 = vpack.c.bf16 %v116, %v116
    %v123 = vpack.c.bf16 %v117, %v117
    %v124 = vpack.c.bf16 %v118, %v118
    %v125 = vpack.c.bf16 %v119, %v119
    %v126 = vpack.c.bf16 %v120, %v120
    %v127 = vpack.c.bf16 %v121, %v121
    %v128 = vld [vmem:[#allocation2] sm:$0xff]
    %v129 = vld [vmem:[#allocation2 + $0x8] sm:$0xff]
    %v130 = vld [vmem:[#allocation2 + $0x10] sm:$0xff]
    %v131 = vld [vmem:[#allocation2 + $0x18] sm:$0xff]
    %v132 = vld [vmem:[#allocation2 + $0x20] sm:$0xff]
    %v133 = vld [vmem:[#allocation2 + $0x28] sm:$0xff]
    %v134 = vld [vmem:[#allocation2 + $0x30] sm:$0xff]
    %v135 = vld [vmem:[#allocation2 + $0x38] sm:$0xff]
    %v136 = vld [vmem:[#allocation2 + $0x40] sm:$0xff]
    %v137 = vld [vmem:[#allocation2 + $0x48] sm:$0xff]
    %v138 = vld [vmem:[#allocation2 + $0x50] sm:$0xff]
    %v139 = vld [vmem:[#allocation2 + $0x58] sm:$0xff]
    %v140 = vld [vmem:[#allocation2 + $0x60] sm:$0xff]
    %v141 = vld [vmem:[#allocation2 + $0x68] sm:$0xff]
    %v142 = vld [vmem:[#allocation2 + $0x70] sm:$0xff]
    %v143 = vld [vmem:[#allocation2 + $0x78] sm:$0xff]
    %v144 = vld [vmem:[#allocation2 + $0x80] sm:$0xff]
    %v145 = vld [vmem:[#allocation2 + $0x88] sm:$0xff]
    %v146 = vld [vmem:[#allocation2 + $0x90] sm:$0xff]
    %v147 = vld [vmem:[#allocation2 + $0x98] sm:$0xff]
    %v148 = vld [vmem:[#allocation2 + $0xa0] sm:$0xff]
    %v149 = vld [vmem:[#allocation2 + $0xa8] sm:$0xff]
    %v150 = vld [vmem:[#allocation2 + $0xb0] sm:$0xff]
    %v151 = vld [vmem:[#allocation2 + $0xb8] sm:$0xff]
    %v152 = vld [vmem:[#allocation2 + $0xc0] sm:$0xff]
    %v153 = vld [vmem:[#allocation2 + $0xc8] sm:$0xff]
    %v154 = vld [vmem:[#allocation2 + $0xd0] sm:$0xff]
    %v155 = vld [vmem:[#allocation2 + $0xd8] sm:$0xff]
    %v156 = vld [vmem:[#allocation2 + $0xe0] sm:$0xff]
    %v157 = vld [vmem:[#allocation2 + $0xe8] sm:$0xff]
    %v158 = vld [vmem:[#allocation2 + $0xf0] sm:$0xff]
    %v159 = vld [vmem:[#allocation2 + $0xf8] sm:$0xff]
    %v160 = vld [vmem:[#allocation2 + $0x100] sm:$0xff]
    %v161 = vld [vmem:[#allocation2 + $0x108] sm:$0xff]
    %v162 = vld [vmem:[#allocation2 + $0x110] sm:$0xff]
    %v163 = vld [vmem:[#allocation2 + $0x118] sm:$0xff]
    %v164 = vld [vmem:[#allocation2 + $0x120] sm:$0xff]
    %v165 = vld [vmem:[#allocation2 + $0x128] sm:$0xff]
    %v166 = vld [vmem:[#allocation2 + $0x130] sm:$0xff]
    %v167 = vld [vmem:[#allocation2 + $0x138] sm:$0xff]
    %v168 = vld [vmem:[#allocation2 + $0x140] sm:$0xff]
    %v169 = vld [vmem:[#allocation2 + $0x148] sm:$0xff]
    %v170 = vld [vmem:[#allocation2 + $0x150] sm:$0xff]
    %v171 = vld [vmem:[#allocation2 + $0x158] sm:$0xff]
    %v172 = vld [vmem:[#allocation2 + $0x160] sm:$0xff]
    %v173 = vld [vmem:[#allocation2 + $0x168] sm:$0xff]
    %v174 = vld [vmem:[#allocation2 + $0x170] sm:$0xff]
    %v175 = vld [vmem:[#allocation2 + $0x178] sm:$0xff]
    %v176 = vld [vmem:[#allocation2 + $0x180] sm:$0xff]
    %v177 = vld [vmem:[#allocation2 + $0x188] sm:$0xff]
    %v178 = vld [vmem:[#allocation2 + $0x190] sm:$0xff]
    %v179 = vld [vmem:[#allocation2 + $0x198] sm:$0xff]
    %v180 = vld [vmem:[#allocation2 + $0x1a0] sm:$0xff]
    %v181 = vld [vmem:[#allocation2 + $0x1a8] sm:$0xff]
    %v182 = vld [vmem:[#allocation2 + $0x1b0] sm:$0xff]
    %v183 = vld [vmem:[#allocation2 + $0x1b8] sm:$0xff]
    %v184 = vld [vmem:[#allocation2 + $0x1c0] sm:$0xff]
    %v185 = vld [vmem:[#allocation2 + $0x1c8] sm:$0xff]
    %v186 = vld [vmem:[#allocation2 + $0x1d0] sm:$0xff]
    %v187 = vld [vmem:[#allocation2 + $0x1d8] sm:$0xff]
    %v188 = vld [vmem:[#allocation2 + $0x1e0] sm:$0xff]
    %v189 = vld [vmem:[#allocation2 + $0x1e8] sm:$0xff]
    %v190 = vld [vmem:[#allocation2 + $0x1f0] sm:$0xff]
    %v191 = vld [vmem:[#allocation2 + $0x1f8] sm:$0xff]
    %v192 = vld [vmem:[#allocation2 + $0x200] sm:$0xff]
    %v193 = vld [vmem:[#allocation2 + $0x208] sm:$0xff]
    %v194 = vld [vmem:[#allocation2 + $0x210] sm:$0xff]
    %v195 = vld [vmem:[#allocation2 + $0x218] sm:$0xff]
    %v196 = vld [vmem:[#allocation2 + $0x220] sm:$0xff]
    %v197 = vld [vmem:[#allocation2 + $0x228] sm:$0xff]
    %v198 = vld [vmem:[#allocation2 + $0x230] sm:$0xff]
    %v199 = vld [vmem:[#allocation2 + $0x238] sm:$0xff]
    %v200 = vld [vmem:[#allocation2 + $0x240] sm:$0xff]
    %v201 = vld [vmem:[#allocation2 + $0x248] sm:$0xff]
    %v202 = vld [vmem:[#allocation2 + $0x250] sm:$0xff]
    %v203 = vld [vmem:[#allocation2 + $0x258] sm:$0xff]
    %v204 = vld [vmem:[#allocation2 + $0x260] sm:$0xff]
    %v205 = vld [vmem:[#allocation2 + $0x268] sm:$0xff]
    %v206 = vld [vmem:[#allocation2 + $0x270] sm:$0xff]
    %v207 = vld [vmem:[#allocation2 + $0x278] sm:$0xff]
    %v208 = vld [vmem:[#allocation2 + $0x280] sm:$0xff]
    %v209 = vld [vmem:[#allocation2 + $0x288] sm:$0xff]
    %v210 = vld [vmem:[#allocation2 + $0x290] sm:$0xff]
    %v211 = vld [vmem:[#allocation2 + $0x298] sm:$0xff]
    %v212 = vld [vmem:[#allocation2 + $0x2a0] sm:$0xff]
    %v213 = vld [vmem:[#allocation2 + $0x2a8] sm:$0xff]
    %v214 = vld [vmem:[#allocation2 + $0x2b0] sm:$0xff]
    %v215 = vld [vmem:[#allocation2 + $0x2b8] sm:$0xff]
    %v216 = vld [vmem:[#allocation2 + $0x2c0] sm:$0xff]
    %v217 = vld [vmem:[#allocation2 + $0x2c8] sm:$0xff]
    %v218 = vld [vmem:[#allocation2 + $0x2d0] sm:$0xff]
    %v219 = vld [vmem:[#allocation2 + $0x2d8] sm:$0xff]
    %v220 = vld [vmem:[#allocation2 + $0x2e0] sm:$0xff]
    %v221 = vld [vmem:[#allocation2 + $0x2e8] sm:$0xff]
    %v222 = vld [vmem:[#allocation2 + $0x2f0] sm:$0xff]
    %v223 = vld [vmem:[#allocation2 + $0x2f8] sm:$0xff]
    %v224 = vld [vmem:[#allocation4] sm:$0xff]
    %v225 = vld [vmem:[#allocation4 + $0x8] sm:$0xff]
    %v226 = vld [vmem:[#allocation4 + $0x10] sm:$0xff]
    %v227 = vld [vmem:[#allocation4 + $0x18] sm:$0xff]
    %v228 = vld [vmem:[#allocation4 + $0x20] sm:$0xff]
    %v229 = vld [vmem:[#allocation4 + $0x28] sm:$0xff]
    %v230 = vld [vmem:[#allocation4 + $0x30] sm:$0xff]
    %v231 = vld [vmem:[#allocation4 + $0x38] sm:$0xff]
    %v232 = vld [vmem:[#allocation4 + $0x40] sm:$0xff]
    %v233 = vld [vmem:[#allocation4 + $0x48] sm:$0xff]
    %v234 = vld [vmem:[#allocation4 + $0x50] sm:$0xff]
    %v235 = vld [vmem:[#allocation4 + $0x58] sm:$0xff]
    %v236 = vld [vmem:[#allocation4 + $0x60] sm:$0xff]
    %v237 = vld [vmem:[#allocation4 + $0x68] sm:$0xff]
    %v238 = vld [vmem:[#allocation4 + $0x70] sm:$0xff]
    %v239 = vld [vmem:[#allocation4 + $0x78] sm:$0xff]
    %v240 = vld [vmem:[#allocation4 + $0x80] sm:$0xff]
    %v241 = vld [vmem:[#allocation4 + $0x88] sm:$0xff]
    %v242 = vld [vmem:[#allocation4 + $0x90] sm:$0xff]
    %v243 = vld [vmem:[#allocation4 + $0x98] sm:$0xff]
    %v244 = vld [vmem:[#allocation4 + $0xa0] sm:$0xff]
    %v245 = vld [vmem:[#allocation4 + $0xa8] sm:$0xff]
    %v246 = vld [vmem:[#allocation4 + $0xb0] sm:$0xff]
    %v247 = vld [vmem:[#allocation4 + $0xb8] sm:$0xff]
    %v248 = vld [vmem:[#allocation4 + $0xc0] sm:$0xff]
    %v249 = vld [vmem:[#allocation4 + $0xc8] sm:$0xff]
    %v250 = vld [vmem:[#allocation4 + $0xd0] sm:$0xff]
    %v251 = vld [vmem:[#allocation4 + $0xd8] sm:$0xff]
    %v252 = vld [vmem:[#allocation4 + $0xe0] sm:$0xff]
    %v253 = vld [vmem:[#allocation4 + $0xe8] sm:$0xff]
    %v254 = vld [vmem:[#allocation4 + $0xf0] sm:$0xff]
    %v255 = vld [vmem:[#allocation4 + $0xf8] sm:$0xff]
    %v256 = vld [vmem:[#allocation4 + $0x100] sm:$0xff]
    %v257 = vld [vmem:[#allocation4 + $0x108] sm:$0xff]
    %v258 = vld [vmem:[#allocation4 + $0x110] sm:$0xff]
    %v259 = vld [vmem:[#allocation4 + $0x118] sm:$0xff]
    %v260 = vld [vmem:[#allocation4 + $0x120] sm:$0xff]
    %v261 = vld [vmem:[#allocation4 + $0x128] sm:$0xff]
    %v262 = vld [vmem:[#allocation4 + $0x130] sm:$0xff]
    %v263 = vld [vmem:[#allocation4 + $0x138] sm:$0xff]
    %v264 = vld [vmem:[#allocation4 + $0x140] sm:$0xff]
    %v265 = vld [vmem:[#allocation4 + $0x148] sm:$0xff]
    %v266 = vld [vmem:[#allocation4 + $0x150] sm:$0xff]
    %v267 = vld [vmem:[#allocation4 + $0x158] sm:$0xff]
    %v268 = vld [vmem:[#allocation4 + $0x160] sm:$0xff]
    %v269 = vld [vmem:[#allocation4 + $0x168] sm:$0xff]
    %v270 = vld [vmem:[#allocation4 + $0x170] sm:$0xff]
    %v271 = vld [vmem:[#allocation4 + $0x178] sm:$0xff]
    %v272 = vld [vmem:[#allocation4 + $0x180] sm:$0xff]
    %v273 = vld [vmem:[#allocation4 + $0x188] sm:$0xff]
    %v274 = vld [vmem:[#allocation4 + $0x190] sm:$0xff]
    %v275 = vld [vmem:[#allocation4 + $0x198] sm:$0xff]
    %v276 = vld [vmem:[#allocation4 + $0x1a0] sm:$0xff]
    %v277 = vld [vmem:[#allocation4 + $0x1a8] sm:$0xff]
    %v278 = vld [vmem:[#allocation4 + $0x1b0] sm:$0xff]
    %v279 = vld [vmem:[#allocation4 + $0x1b8] sm:$0xff]
    %v280 = vld [vmem:[#allocation4 + $0x1c0] sm:$0xff]
    %v281 = vld [vmem:[#allocation4 + $0x1c8] sm:$0xff]
    %v282 = vld [vmem:[#allocation4 + $0x1d0] sm:$0xff]
    %v283 = vld [vmem:[#allocation4 + $0x1d8] sm:$0xff]
    %v284 = vld [vmem:[#allocation4 + $0x1e0] sm:$0xff]
    %v285 = vld [vmem:[#allocation4 + $0x1e8] sm:$0xff]
    %v286 = vld [vmem:[#allocation4 + $0x1f0] sm:$0xff]
    %v287 = vld [vmem:[#allocation4 + $0x1f8] sm:$0xff]
    %v288 = vld [vmem:[#allocation4 + $0x200] sm:$0xff]
    %v289 = vld [vmem:[#allocation4 + $0x208] sm:$0xff]
    %v290 = vld [vmem:[#allocation4 + $0x210] sm:$0xff]
    %v291 = vld [vmem:[#allocation4 + $0x218] sm:$0xff]
    %v292 = vld [vmem:[#allocation4 + $0x220] sm:$0xff]
    %v293 = vld [vmem:[#allocation4 + $0x228] sm:$0xff]
    %v294 = vld [vmem:[#allocation4 + $0x230] sm:$0xff]
    %v295 = vld [vmem:[#allocation4 + $0x238] sm:$0xff]
    %v296 = vld [vmem:[#allocation4 + $0x240] sm:$0xff]
    %v297 = vld [vmem:[#allocation4 + $0x248] sm:$0xff]
    %v298 = vld [vmem:[#allocation4 + $0x250] sm:$0xff]
    %v299 = vld [vmem:[#allocation4 + $0x258] sm:$0xff]
    %v300 = vld [vmem:[#allocation4 + $0x260] sm:$0xff]
    %v301 = vld [vmem:[#allocation4 + $0x268] sm:$0xff]
    %v302 = vld [vmem:[#allocation4 + $0x270] sm:$0xff]
    %v303 = vld [vmem:[#allocation4 + $0x278] sm:$0xff]
    %v304 = vld [vmem:[#allocation4 + $0x280] sm:$0xff]
    %v305 = vld [vmem:[#allocation4 + $0x288] sm:$0xff]
    %v306 = vld [vmem:[#allocation4 + $0x290] sm:$0xff]
    %v307 = vld [vmem:[#allocation4 + $0x298] sm:$0xff]
    %v308 = vld [vmem:[#allocation4 + $0x2a0] sm:$0xff]
    %v309 = vld [vmem:[#allocation4 + $0x2a8] sm:$0xff]
    %v310 = vld [vmem:[#allocation4 + $0x2b0] sm:$0xff]
    %v311 = vld [vmem:[#allocation4 + $0x2b8] sm:$0xff]
    %v312 = vld [vmem:[#allocation4 + $0x2c0] sm:$0xff]
    %v313 = vld [vmem:[#allocation4 + $0x2c8] sm:$0xff]
    %v314 = vld [vmem:[#allocation4 + $0x2d0] sm:$0xff]
    %v315 = vld [vmem:[#allocation4 + $0x2d8] sm:$0xff]
    %v316 = vld [vmem:[#allocation4 + $0x2e0] sm:$0xff]
    %v317 = vld [vmem:[#allocation4 + $0x2e8] sm:$0xff]
    %v318 = vld [vmem:[#allocation4 + $0x2f0] sm:$0xff]
    %v319 = vld [vmem:[#allocation4 + $0x2f8] sm:$0xff]
    %v416 = vunpack.c.l.b16 %v224
    %v417 = vunpack.c.h.b16 %v224
    %v418 = vunpack.c.l.b16 %v225
    %v419 = vunpack.c.h.b16 %v225
    %v420 = vunpack.c.l.b16 %v226
    %v421 = vunpack.c.h.b16 %v226
    %v422 = vunpack.c.l.b16 %v227
    %v423 = vunpack.c.h.b16 %v227
    %v424 = vunpack.c.l.b16 %v228
    %v425 = vunpack.c.h.b16 %v228
    %v426 = vunpack.c.l.b16 %v229
    %v427 = vunpack.c.h.b16 %v229
    %v428 = vunpack.c.l.b16 %v230
    %v429 = vunpack.c.h.b16 %v230
    %v430 = vunpack.c.l.b16 %v231
    %v431 = vunpack.c.h.b16 %v231
    %v432 = vunpack.c.l.b16 %v232
    %v433 = vunpack.c.h.b16 %v232
    %v434 = vunpack.c.l.b16 %v233
    %v435 = vunpack.c.h.b16 %v233
    %v436 = vunpack.c.l.b16 %v234
    %v437 = vunpack.c.h.b16 %v234
    %v438 = vunpack.c.l.b16 %v235
    %v439 = vunpack.c.h.b16 %v235
    %v440 = vunpack.c.l.b16 %v236
    %v441 = vunpack.c.h.b16 %v236
    %v442 = vunpack.c.l.b16 %v237
    %v443 = vunpack.c.h.b16 %v237
    %v444 = vunpack.c.l.b16 %v238
    %v445 = vunpack.c.h.b16 %v238
    %v446 = vunpack.c.l.b16 %v239
    %v447 = vunpack.c.h.b16 %v239
    %v448 = vunpack.c.l.b16 %v240
    %v449 = vunpack.c.h.b16 %v240
    %v450 = vunpack.c.l.b16 %v241
    %v451 = vunpack.c.h.b16 %v241
    %v452 = vunpack.c.l.b16 %v242
    %v453 = vunpack.c.h.b16 %v242
    %v454 = vunpack.c.l.b16 %v243
    %v455 = vunpack.c.h.b16 %v243
    %v456 = vunpack.c.l.b16 %v244
    %v457 = vunpack.c.h.b16 %v244
    %v458 = vunpack.c.l.b16 %v245
    %v459 = vunpack.c.h.b16 %v245
    %v460 = vunpack.c.l.b16 %v246
    %v461 = vunpack.c.h.b16 %v246
    %v462 = vunpack.c.l.b16 %v247
    %v463 = vunpack.c.h.b16 %v247
    %v464 = vunpack.c.l.b16 %v248
    %v465 = vunpack.c.h.b16 %v248
    %v466 = vunpack.c.l.b16 %v249
    %v467 = vunpack.c.h.b16 %v249
    %v468 = vunpack.c.l.b16 %v250
    %v469 = vunpack.c.h.b16 %v250
    %v470 = vunpack.c.l.b16 %v251
    %v471 = vunpack.c.h.b16 %v251
    %v472 = vunpack.c.l.b16 %v252
    %v473 = vunpack.c.h.b16 %v252
    %v474 = vunpack.c.l.b16 %v253
    %v475 = vunpack.c.h.b16 %v253
    %v476 = vunpack.c.l.b16 %v254
    %v477 = vunpack.c.h.b16 %v254
    %v478 = vunpack.c.l.b16 %v255
    %v479 = vunpack.c.h.b16 %v255
    %v480 = vunpack.c.l.b16 %v256
    %v481 = vunpack.c.h.b16 %v256
    %v482 = vunpack.c.l.b16 %v257
    %v483 = vunpack.c.h.b16 %v257
    %v484 = vunpack.c.l.b16 %v258
    %v485 = vunpack.c.h.b16 %v258
    %v486 = vunpack.c.l.b16 %v259
    %v487 = vunpack.c.h.b16 %v259
    %v488 = vunpack.c.l.b16 %v260
    %v489 = vunpack.c.h.b16 %v260
    %v490 = vunpack.c.l.b16 %v261
    %v491 = vunpack.c.h.b16 %v261
    %v492 = vunpack.c.l.b16 %v262
    %v493 = vunpack.c.h.b16 %v262
    %v494 = vunpack.c.l.b16 %v263
    %v495 = vunpack.c.h.b16 %v263
    %v496 = vunpack.c.l.b16 %v264
    %v497 = vunpack.c.h.b16 %v264
    %v498 = vunpack.c.l.b16 %v265
    %v499 = vunpack.c.h.b16 %v265
    %v500 = vunpack.c.l.b16 %v266
    %v501 = vunpack.c.h.b16 %v266
    %v502 = vunpack.c.l.b16 %v267
    %v503 = vunpack.c.h.b16 %v267
    %v504 = vunpack.c.l.b16 %v268
    %v505 = vunpack.c.h.b16 %v268
    %v506 = vunpack.c.l.b16 %v269
    %v507 = vunpack.c.h.b16 %v269
    %v508 = vunpack.c.l.b16 %v270
    %v509 = vunpack.c.h.b16 %v270
    %v510 = vunpack.c.l.b16 %v271
    %v511 = vunpack.c.h.b16 %v271
    %v512 = vunpack.c.l.b16 %v272
    %v513 = vunpack.c.h.b16 %v272
    %v514 = vunpack.c.l.b16 %v273
    %v515 = vunpack.c.h.b16 %v273
    %v516 = vunpack.c.l.b16 %v274
    %v517 = vunpack.c.h.b16 %v274
    %v518 = vunpack.c.l.b16 %v275
    %v519 = vunpack.c.h.b16 %v275
    %v520 = vunpack.c.l.b16 %v276
    %v521 = vunpack.c.h.b16 %v276
    %v522 = vunpack.c.l.b16 %v277
    %v523 = vunpack.c.h.b16 %v277
    %v524 = vunpack.c.l.b16 %v278
    %v525 = vunpack.c.h.b16 %v278
    %v526 = vunpack.c.l.b16 %v279
    %v527 = vunpack.c.h.b16 %v279
    %v528 = vunpack.c.l.b16 %v280
    %v529 = vunpack.c.h.b16 %v280
    %v530 = vunpack.c.l.b16 %v281
    %v531 = vunpack.c.h.b16 %v281
    %v532 = vunpack.c.l.b16 %v282
    %v533 = vunpack.c.h.b16 %v282
    %v534 = vunpack.c.l.b16 %v283
    %v535 = vunpack.c.h.b16 %v283
    %v536 = vunpack.c.l.b16 %v284
    %v537 = vunpack.c.h.b16 %v284
    %v538 = vunpack.c.l.b16 %v285
    %v539 = vunpack.c.h.b16 %v285
    %v540 = vunpack.c.l.b16 %v286
    %v541 = vunpack.c.h.b16 %v286
    %v542 = vunpack.c.l.b16 %v287
    %v543 = vunpack.c.h.b16 %v287
    %v544 = vunpack.c.l.b16 %v288
    %v545 = vunpack.c.h.b16 %v288
    %v546 = vunpack.c.l.b16 %v289
    %v547 = vunpack.c.h.b16 %v289
    %v548 = vunpack.c.l.b16 %v290
    %v549 = vunpack.c.h.b16 %v290
    %v550 = vunpack.c.l.b16 %v291
    %v551 = vunpack.c.h.b16 %v291
    %v552 = vunpack.c.l.b16 %v292
    %v553 = vunpack.c.h.b16 %v292
    %v554 = vunpack.c.l.b16 %v293
    %v555 = vunpack.c.h.b16 %v293
    %v556 = vunpack.c.l.b16 %v294
    %v557 = vunpack.c.h.b16 %v294
    %v558 = vunpack.c.l.b16 %v295
    %v559 = vunpack.c.h.b16 %v295
    %v560 = vunpack.c.l.b16 %v296
    %v561 = vunpack.c.h.b16 %v296
    %v562 = vunpack.c.l.b16 %v297
    %v563 = vunpack.c.h.b16 %v297
    %v564 = vunpack.c.l.b16 %v298
    %v565 = vunpack.c.h.b16 %v298
    %v566 = vunpack.c.l.b16 %v299
    %v567 = vunpack.c.h.b16 %v299
    %v568 = vunpack.c.l.b16 %v300
    %v569 = vunpack.c.h.b16 %v300
    %v570 = vunpack.c.l.b16 %v301
    %v571 = vunpack.c.h.b16 %v301
    %v572 = vunpack.c.l.b16 %v302
    %v573 = vunpack.c.h.b16 %v302
    %v574 = vunpack.c.l.b16 %v303
    %v575 = vunpack.c.h.b16 %v303
    %v576 = vunpack.c.l.b16 %v304
    %v577 = vunpack.c.h.b16 %v304
    %v578 = vunpack.c.l.b16 %v305
    %v579 = vunpack.c.h.b16 %v305
    %v580 = vunpack.c.l.b16 %v306
    %v581 = vunpack.c.h.b16 %v306
    %v582 = vunpack.c.l.b16 %v307
    %v583 = vunpack.c.h.b16 %v307
    %v584 = vunpack.c.l.b16 %v308
    %v585 = vunpack.c.h.b16 %v308
    %v586 = vunpack.c.l.b16 %v309
    %v587 = vunpack.c.h.b16 %v309
    %v588 = vunpack.c.l.b16 %v310
    %v589 = vunpack.c.h.b16 %v310
    %v590 = vunpack.c.l.b16 %v311
    %v591 = vunpack.c.h.b16 %v311
    %v592 = vunpack.c.l.b16 %v312
    %v593 = vunpack.c.h.b16 %v312
    %v594 = vunpack.c.l.b16 %v313
    %v595 = vunpack.c.h.b16 %v313
    %v596 = vunpack.c.l.b16 %v314
    %v597 = vunpack.c.h.b16 %v314
    %v598 = vunpack.c.l.b16 %v315
    %v599 = vunpack.c.h.b16 %v315
    %v600 = vunpack.c.l.b16 %v316
    %v601 = vunpack.c.h.b16 %v316
    %v602 = vunpack.c.l.b16 %v317
    %v603 = vunpack.c.h.b16 %v317
    %v604 = vunpack.c.l.b16 %v318
    %v605 = vunpack.c.h.b16 %v318
    %v606 = vunpack.c.l.b16 %v319
    %v607 = vunpack.c.h.b16 %v319
    %v608 = vpack.c.b16 %v418, %v416
    %v609 = vpack.c.b16 %v419, %v417
    %v610 = vpack.c.b16 %v422, %v420
    %v611 = vpack.c.b16 %v423, %v421
    %v612 = vpack.c.b16 %v426, %v424
    %v613 = vpack.c.b16 %v427, %v425
    %v614 = vpack.c.b16 %v430, %v428
    %v615 = vpack.c.b16 %v431, %v429
    %v616 = vpack.c.b16 %v434, %v432
    %v617 = vpack.c.b16 %v435, %v433
    %v618 = vpack.c.b16 %v438, %v436
    %v619 = vpack.c.b16 %v439, %v437
    %v620 = vpack.c.b16 %v442, %v440
    %v621 = vpack.c.b16 %v443, %v441
    %v622 = vpack.c.b16 %v446, %v444
    %v623 = vpack.c.b16 %v447, %v445
    %v624 = vpack.c.b16 %v450, %v448
    %v625 = vpack.c.b16 %v451, %v449
    %v626 = vpack.c.b16 %v454, %v452
    %v627 = vpack.c.b16 %v455, %v453
    %v628 = vpack.c.b16 %v458, %v456
    %v629 = vpack.c.b16 %v459, %v457
    %v630 = vpack.c.b16 %v462, %v460
    %v631 = vpack.c.b16 %v463, %v461
    %v632 = vpack.c.b16 %v466, %v464
    %v633 = vpack.c.b16 %v467, %v465
    %v634 = vpack.c.b16 %v470, %v468
    %v635 = vpack.c.b16 %v471, %v469
    %v636 = vpack.c.b16 %v474, %v472
    %v637 = vpack.c.b16 %v475, %v473
    %v638 = vpack.c.b16 %v478, %v476
    %v639 = vpack.c.b16 %v479, %v477
    %v640 = vpack.c.b16 %v482, %v480
    %v641 = vpack.c.b16 %v483, %v481
    %v642 = vpack.c.b16 %v486, %v484
    %v643 = vpack.c.b16 %v487, %v485
    %v644 = vpack.c.b16 %v490, %v488
    %v645 = vpack.c.b16 %v491, %v489
    %v646 = vpack.c.b16 %v494, %v492
    %v647 = vpack.c.b16 %v495, %v493
    %v648 = vpack.c.b16 %v498, %v496
    %v649 = vpack.c.b16 %v499, %v497
    %v650 = vpack.c.b16 %v502, %v500
    %v651 = vpack.c.b16 %v503, %v501
    %v652 = vpack.c.b16 %v506, %v504
    %v653 = vpack.c.b16 %v507, %v505
    %v654 = vpack.c.b16 %v510, %v508
    %v655 = vpack.c.b16 %v511, %v509
    %v656 = vpack.c.b16 %v514, %v512
    %v657 = vpack.c.b16 %v515, %v513
    %v658 = vpack.c.b16 %v518, %v516
    %v659 = vpack.c.b16 %v519, %v517
    %v660 = vpack.c.b16 %v522, %v520
    %v661 = vpack.c.b16 %v523, %v521
    %v662 = vpack.c.b16 %v526, %v524
    %v663 = vpack.c.b16 %v527, %v525
    %v664 = vpack.c.b16 %v530, %v528
    %v665 = vpack.c.b16 %v531, %v529
    %v666 = vpack.c.b16 %v534, %v532
    %v667 = vpack.c.b16 %v535, %v533
    %v668 = vpack.c.b16 %v538, %v536
    %v669 = vpack.c.b16 %v539, %v537
    %v670 = vpack.c.b16 %v542, %v540
    %v671 = vpack.c.b16 %v543, %v541
    %v672 = vpack.c.b16 %v546, %v544
    %v673 = vpack.c.b16 %v547, %v545
    %v674 = vpack.c.b16 %v550, %v548
    %v675 = vpack.c.b16 %v551, %v549
    %v676 = vpack.c.b16 %v554, %v552
    %v677 = vpack.c.b16 %v555, %v553
    %v678 = vpack.c.b16 %v558, %v556
    %v679 = vpack.c.b16 %v559, %v557
    %v680 = vpack.c.b16 %v562, %v560
    %v681 = vpack.c.b16 %v563, %v561
    %v682 = vpack.c.b16 %v566, %v564
    %v683 = vpack.c.b16 %v567, %v565
    %v684 = vpack.c.b16 %v570, %v568
    %v685 = vpack.c.b16 %v571, %v569
    %v686 = vpack.c.b16 %v574, %v572
    %v687 = vpack.c.b16 %v575, %v573
    %v688 = vpack.c.b16 %v578, %v576
    %v689 = vpack.c.b16 %v579, %v577
    %v690 = vpack.c.b16 %v582, %v580
    %v691 = vpack.c.b16 %v583, %v581
    %v692 = vpack.c.b16 %v586, %v584
    %v693 = vpack.c.b16 %v587, %v585
    %v694 = vpack.c.b16 %v590, %v588
    %v695 = vpack.c.b16 %v591, %v589
    %v696 = vpack.c.b16 %v594, %v592
    %v697 = vpack.c.b16 %v595, %v593
    %v698 = vpack.c.b16 %v598, %v596
    %v699 = vpack.c.b16 %v599, %v597
    %v700 = vpack.c.b16 %v602, %v600
    %v701 = vpack.c.b16 %v603, %v601
    %v702 = vpack.c.b16 %v606, %v604
    %v703 = vpack.c.b16 %v607, %v605
    %800 = vmatpush.bf16.msra.mxu0 %v622
    %801 = vmatpush.bf16.msra.mxu0 %v620
    %802 = vmatpush.bf16.msra.mxu0 %v618
    %803 = vmatpush.bf16.msra.mxu0 %v616
    %804 = vmatpush.bf16.msra.mxu0 %v614
    %805 = vmatpush.bf16.msra.mxu0 %v612
    %806 = vmatpush.bf16.msra.mxu0 %v610
    %807 = vmatpush.bf16.msra.mxu0 %v608
    %808 = vmatmul.bf16.gmra.mxu0 %v122
    %v809 = vpop.f32.mrf.mxu0
    %v810 = vadd.f32 0.0, %v809
    %v811 = vpop.f32.mrf.mxu0
    %812 = vdwg.mxu0
    %813 = vmatpush.bf16.msra.mxu0 %v638
    %814 = vmatpush.bf16.msra.mxu0 %v636
    %815 = vmatpush.bf16.msra.mxu0 %v634
    %816 = vmatpush.bf16.msra.mxu0 %v632
    %817 = vmatpush.bf16.msra.mxu0 %v630
    %818 = vmatpush.bf16.msra.mxu0 %v628
    %819 = vmatpush.bf16.msra.mxu0 %v626
    %820 = vmatpush.bf16.msra.mxu0 %v624
    %821 = vmatmul.bf16.gmra.mxu0 %v123
    %v822 = vpop.f32.mrf.mxu0
    %v823 = vadd.f32 %v810, %v822
    %v824 = vpop.f32.mrf.mxu0
    %825 = vdwg.mxu0
    %826 = vmatpush.bf16.msra.mxu0 %v654
    %827 = vmatpush.bf16.msra.mxu0 %v652
    %828 = vmatpush.bf16.msra.mxu0 %v650
    %829 = vmatpush.bf16.msra.mxu0 %v648
    %830 = vmatpush.bf16.msra.mxu0 %v646
    %831 = vmatpush.bf16.msra.mxu0 %v644
    %832 = vmatpush.bf16.msra.mxu0 %v642
    %833 = vmatpush.bf16.msra.mxu0 %v640
    %834 = vmatmul.bf16.gmra.mxu0 %v124
    %v835 = vpop.f32.mrf.mxu0
    %v836 = vadd.f32 %v823, %v835
    %v837 = vpop.f32.mrf.mxu0
    %838 = vdwg.mxu0
    %839 = vmatpush.bf16.msra.mxu0 %v670
    %840 = vmatpush.bf16.msra.mxu0 %v668
    %841 = vmatpush.bf16.msra.mxu0 %v666
    %842 = vmatpush.bf16.msra.mxu0 %v664
    %843 = vmatpush.bf16.msra.mxu0 %v662
    %844 = vmatpush.bf16.msra.mxu0 %v660
    %845 = vmatpush.bf16.msra.mxu0 %v658
    %846 = vmatpush.bf16.msra.mxu0 %v656
    %847 = vmatmul.bf16.gmra.mxu0 %v125
    %v848 = vpop.f32.mrf.mxu0
    %v849 = vadd.f32 %v836, %v848
    %v850 = vpop.f32.mrf.mxu0
    %851 = vdwg.mxu0
    %852 = vmatpush.bf16.msra.mxu0 %v686
    %853 = vmatpush.bf16.msra.mxu0 %v684
    %854 = vmatpush.bf16.msra.mxu0 %v682
    %855 = vmatpush.bf16.msra.mxu0 %v680
    %856 = vmatpush.bf16.msra.mxu0 %v678
    %857 = vmatpush.bf16.msra.mxu0 %v676
    %858 = vmatpush.bf16.msra.mxu0 %v674
    %859 = vmatpush.bf16.msra.mxu0 %v672
    %860 = vmatmul.bf16.gmra.mxu0 %v126
    %v861 = vpop.f32.mrf.mxu0
    %v862 = vadd.f32 %v849, %v861
    %v863 = vpop.f32.mrf.mxu0
    %864 = vdwg.mxu0
    %865 = vmatpush.bf16.msra.mxu0 %v702
    %866 = vmatpush.bf16.msra.mxu0 %v700
    %867 = vmatpush.bf16.msra.mxu0 %v698
    %868 = vmatpush.bf16.msra.mxu0 %v696
    %869 = vmatpush.bf16.msra.mxu0 %v694
    %870 = vmatpush.bf16.msra.mxu0 %v692
    %871 = vmatpush.bf16.msra.mxu0 %v690
    %872 = vmatpush.bf16.msra.mxu0 %v688
    %873 = vmatmul.bf16.gmra.mxu0 %v127
    %v874 = vpop.f32.mrf.mxu0
    %v875 = vadd.f32 %v862, %v874
    %v876 = vpop.f32.mrf.mxu0
    %877 = vdwg.mxu0
    %878 = vmatpush.bf16.msra.mxu0 %v623
    %879 = vmatpush.bf16.msra.mxu0 %v621
    %880 = vmatpush.bf16.msra.mxu0 %v619
    %881 = vmatpush.bf16.msra.mxu0 %v617
    %882 = vmatpush.bf16.msra.mxu0 %v615
    %883 = vmatpush.bf16.msra.mxu0 %v613
    %884 = vmatpush.bf16.msra.mxu0 %v611
    %885 = vmatpush.bf16.msra.mxu0 %v609
    %886 = vmatmul.bf16.gmra.mxu0 %v122
    %v887 = vpop.f32.mrf.mxu0
    %v888 = vadd.f32 0.0, %v887
    %v889 = vpop.f32.mrf.mxu0
    %890 = vdwg.mxu0
    %891 = vmatpush.bf16.msra.mxu0 %v639
    %892 = vmatpush.bf16.msra.mxu0 %v637
    %893 = vmatpush.bf16.msra.mxu0 %v635
    %894 = vmatpush.bf16.msra.mxu0 %v633
    %895 = vmatpush.bf16.msra.mxu0 %v631
    %896 = vmatpush.bf16.msra.mxu0 %v629
    %897 = vmatpush.bf16.msra.mxu0 %v627
    %898 = vmatpush.bf16.msra.mxu0 %v625
    %899 = vmatmul.bf16.gmra.mxu0 %v123
    %v900 = vpop.f32.mrf.mxu0
    %v901 = vadd.f32 %v888, %v900
    %v902 = vpop.f32.mrf.mxu0
    %903 = vdwg.mxu0
    %904 = vmatpush.bf16.msra.mxu0 %v655
    %905 = vmatpush.bf16.msra.mxu0 %v653
    %906 = vmatpush.bf16.msra.mxu0 %v651
    %907 = vmatpush.bf16.msra.mxu0 %v649
    %908 = vmatpush.bf16.msra.mxu0 %v647
    %909 = vmatpush.bf16.msra.mxu0 %v645
    %910 = vmatpush.bf16.msra.mxu0 %v643
    %911 = vmatpush.bf16.msra.mxu0 %v641
    %912 = vmatmul.bf16.gmra.mxu0 %v124
    %v913 = vpop.f32.mrf.mxu0
    %v914 = vadd.f32 %v901, %v913
    %v915 = vpop.f32.mrf.mxu0
    %916 = vdwg.mxu0
    %917 = vmatpush.bf16.msra.mxu0 %v671
    %918 = vmatpush.bf16.msra.mxu0 %v669
    %919 = vmatpush.bf16.msra.mxu0 %v667
    %920 = vmatpush.bf16.msra.mxu0 %v665
    %921 = vmatpush.bf16.msra.mxu0 %v663
    %922 = vmatpush.bf16.msra.mxu0 %v661
    %923 = vmatpush.bf16.msra.mxu0 %v659
    %924 = vmatpush.bf16.msra.mxu0 %v657
    %925 = vmatmul.bf16.gmra.mxu0 %v125
    %v926 = vpop.f32.mrf.mxu0
    %v927 = vadd.f32 %v914, %v926
    %v928 = vpop.f32.mrf.mxu0
    %929 = vdwg.mxu0
    %930 = vmatpush.bf16.msra.mxu0 %v687
    %931 = vmatpush.bf16.msra.mxu0 %v685
    %932 = vmatpush.bf16.msra.mxu0 %v683
    %933 = vmatpush.bf16.msra.mxu0 %v681
    %934 = vmatpush.bf16.msra.mxu0 %v679
    %935 = vmatpush.bf16.msra.mxu0 %v677
    %936 = vmatpush.bf16.msra.mxu0 %v675
    %937 = vmatpush.bf16.msra.mxu0 %v673
    %938 = vmatmul.bf16.gmra.mxu0 %v126
    %v939 = vpop.f32.mrf.mxu0
    %v940 = vadd.f32 %v927, %v939
    %v941 = vpop.f32.mrf.mxu0
    %942 = vdwg.mxu0
    %943 = vmatpush.bf16.msra.mxu0 %v703
    %944 = vmatpush.bf16.msra.mxu0 %v701
    %945 = vmatpush.bf16.msra.mxu0 %v699
    %946 = vmatpush.bf16.msra.mxu0 %v697
    %947 = vmatpush.bf16.msra.mxu0 %v695
    %948 = vmatpush.bf16.msra.mxu0 %v693
    %949 = vmatpush.bf16.msra.mxu0 %v691
    %950 = vmatpush.bf16.msra.mxu0 %v689
    %951 = vmatmul.bf16.gmra.mxu0 %v127
    %v952 = vpop.f32.mrf.mxu0
    %v953 = vadd.f32 %v940, %v952
    %v954 = vpop.f32.mrf.mxu0
    %955 = vdwg.mxu0
    %v1052 = vunpack.c.l.b16 %v128
    %v1053 = vunpack.c.h.b16 %v128
    %v1054 = vunpack.c.l.b16 %v129
    %v1055 = vunpack.c.h.b16 %v129
    %v1056 = vunpack.c.l.b16 %v130
    %v1057 = vunpack.c.h.b16 %v130
    %v1058 = vunpack.c.l.b16 %v131
    %v1059 = vunpack.c.h.b16 %v131
    %v1060 = vunpack.c.l.b16 %v132
    %v1061 = vunpack.c.h.b16 %v132
    %v1062 = vunpack.c.l.b16 %v133
    %v1063 = vunpack.c.h.b16 %v133
    %v1064 = vunpack.c.l.b16 %v134
    %v1065 = vunpack.c.h.b16 %v134
    %v1066 = vunpack.c.l.b16 %v135
    %v1067 = vunpack.c.h.b16 %v135
    %v1068 = vunpack.c.l.b16 %v136
    %v1069 = vunpack.c.h.b16 %v136
    %v1070 = vunpack.c.l.b16 %v137
    %v1071 = vunpack.c.h.b16 %v137
    %v1072 = vunpack.c.l.b16 %v138
    %v1073 = vunpack.c.h.b16 %v138
    %v1074 = vunpack.c.l.b16 %v139
    %v1075 = vunpack.c.h.b16 %v139
    %v1076 = vunpack.c.l.b16 %v140
    %v1077 = vunpack.c.h.b16 %v140
    %v1078 = vunpack.c.l.b16 %v141
    %v1079 = vunpack.c.h.b16 %v141
    %v1080 = vunpack.c.l.b16 %v142
    %v1081 = vunpack.c.h.b16 %v142
    %v1082 = vunpack.c.l.b16 %v143
    %v1083 = vunpack.c.h.b16 %v143
    %v1084 = vunpack.c.l.b16 %v144
    %v1085 = vunpack.c.h.b16 %v144
    %v1086 = vunpack.c.l.b16 %v145
    %v1087 = vunpack.c.h.b16 %v145
    %v1088 = vunpack.c.l.b16 %v146
    %v1089 = vunpack.c.h.b16 %v146
    %v1090 = vunpack.c.l.b16 %v147
    %v1091 = vunpack.c.h.b16 %v147
    %v1092 = vunpack.c.l.b16 %v148
    %v1093 = vunpack.c.h.b16 %v148
    %v1094 = vunpack.c.l.b16 %v149
    %v1095 = vunpack.c.h.b16 %v149
    %v1096 = vunpack.c.l.b16 %v150
    %v1097 = vunpack.c.h.b16 %v150
    %v1098 = vunpack.c.l.b16 %v151
    %v1099 = vunpack.c.h.b16 %v151
    %v1100 = vunpack.c.l.b16 %v152
    %v1101 = vunpack.c.h.b16 %v152
    %v1102 = vunpack.c.l.b16 %v153
    %v1103 = vunpack.c.h.b16 %v153
    %v1104 = vunpack.c.l.b16 %v154
    %v1105 = vunpack.c.h.b16 %v154
    %v1106 = vunpack.c.l.b16 %v155
    %v1107 = vunpack.c.h.b16 %v155
    %v1108 = vunpack.c.l.b16 %v156
    %v1109 = vunpack.c.h.b16 %v156
    %v1110 = vunpack.c.l.b16 %v157
    %v1111 = vunpack.c.h.b16 %v157
    %v1112 = vunpack.c.l.b16 %v158
    %v1113 = vunpack.c.h.b16 %v158
    %v1114 = vunpack.c.l.b16 %v159
    %v1115 = vunpack.c.h.b16 %v159
    %v1116 = vunpack.c.l.b16 %v160
    %v1117 = vunpack.c.h.b16 %v160
    %v1118 = vunpack.c.l.b16 %v161
    %v1119 = vunpack.c.h.b16 %v161
    %v1120 = vunpack.c.l.b16 %v162
    %v1121 = vunpack.c.h.b16 %v162
    %v1122 = vunpack.c.l.b16 %v163
    %v1123 = vunpack.c.h.b16 %v163
    %v1124 = vunpack.c.l.b16 %v164
    %v1125 = vunpack.c.h.b16 %v164
    %v1126 = vunpack.c.l.b16 %v165
    %v1127 = vunpack.c.h.b16 %v165
    %v1128 = vunpack.c.l.b16 %v166
    %v1129 = vunpack.c.h.b16 %v166
    %v1130 = vunpack.c.l.b16 %v167
    %v1131 = vunpack.c.h.b16 %v167
    %v1132 = vunpack.c.l.b16 %v168
    %v1133 = vunpack.c.h.b16 %v168
    %v1134 = vunpack.c.l.b16 %v169
    %v1135 = vunpack.c.h.b16 %v169
    %v1136 = vunpack.c.l.b16 %v170
    %v1137 = vunpack.c.h.b16 %v170
    %v1138 = vunpack.c.l.b16 %v171
    %v1139 = vunpack.c.h.b16 %v171
    %v1140 = vunpack.c.l.b16 %v172
    %v1141 = vunpack.c.h.b16 %v172
    %v1142 = vunpack.c.l.b16 %v173
    %v1143 = vunpack.c.h.b16 %v173
    %v1144 = vunpack.c.l.b16 %v174
    %v1145 = vunpack.c.h.b16 %v174
    %v1146 = vunpack.c.l.b16 %v175
    %v1147 = vunpack.c.h.b16 %v175
    %v1148 = vunpack.c.l.b16 %v176
    %v1149 = vunpack.c.h.b16 %v176
    %v1150 = vunpack.c.l.b16 %v177
    %v1151 = vunpack.c.h.b16 %v177
    %v1152 = vunpack.c.l.b16 %v178
    %v1153 = vunpack.c.h.b16 %v178
    %v1154 = vunpack.c.l.b16 %v179
    %v1155 = vunpack.c.h.b16 %v179
    %v1156 = vunpack.c.l.b16 %v180
    %v1157 = vunpack.c.h.b16 %v180
    %v1158 = vunpack.c.l.b16 %v181
    %v1159 = vunpack.c.h.b16 %v181
    %v1160 = vunpack.c.l.b16 %v182
    %v1161 = vunpack.c.h.b16 %v182
    %v1162 = vunpack.c.l.b16 %v183
    %v1163 = vunpack.c.h.b16 %v183
    %v1164 = vunpack.c.l.b16 %v184
    %v1165 = vunpack.c.h.b16 %v184
    %v1166 = vunpack.c.l.b16 %v185
    %v1167 = vunpack.c.h.b16 %v185
    %v1168 = vunpack.c.l.b16 %v186
    %v1169 = vunpack.c.h.b16 %v186
    %v1170 = vunpack.c.l.b16 %v187
    %v1171 = vunpack.c.h.b16 %v187
    %v1172 = vunpack.c.l.b16 %v188
    %v1173 = vunpack.c.h.b16 %v188
    %v1174 = vunpack.c.l.b16 %v189
    %v1175 = vunpack.c.h.b16 %v189
    %v1176 = vunpack.c.l.b16 %v190
    %v1177 = vunpack.c.h.b16 %v190
    %v1178 = vunpack.c.l.b16 %v191
    %v1179 = vunpack.c.h.b16 %v191
    %v1180 = vunpack.c.l.b16 %v192
    %v1181 = vunpack.c.h.b16 %v192
    %v1182 = vunpack.c.l.b16 %v193
    %v1183 = vunpack.c.h.b16 %v193
    %v1184 = vunpack.c.l.b16 %v194
    %v1185 = vunpack.c.h.b16 %v194
    %v1186 = vunpack.c.l.b16 %v195
    %v1187 = vunpack.c.h.b16 %v195
    %v1188 = vunpack.c.l.b16 %v196
    %v1189 = vunpack.c.h.b16 %v196
    %v1190 = vunpack.c.l.b16 %v197
    %v1191 = vunpack.c.h.b16 %v197
    %v1192 = vunpack.c.l.b16 %v198
    %v1193 = vunpack.c.h.b16 %v198
    %v1194 = vunpack.c.l.b16 %v199
    %v1195 = vunpack.c.h.b16 %v199
    %v1196 = vunpack.c.l.b16 %v200
    %v1197 = vunpack.c.h.b16 %v200
    %v1198 = vunpack.c.l.b16 %v201
    %v1199 = vunpack.c.h.b16 %v201
    %v1200 = vunpack.c.l.b16 %v202
    %v1201 = vunpack.c.h.b16 %v202
    %v1202 = vunpack.c.l.b16 %v203
    %v1203 = vunpack.c.h.b16 %v203
    %v1204 = vunpack.c.l.b16 %v204
    %v1205 = vunpack.c.h.b16 %v204
    %v1206 = vunpack.c.l.b16 %v205
    %v1207 = vunpack.c.h.b16 %v205
    %v1208 = vunpack.c.l.b16 %v206
    %v1209 = vunpack.c.h.b16 %v206
    %v1210 = vunpack.c.l.b16 %v207
    %v1211 = vunpack.c.h.b16 %v207
    %v1212 = vunpack.c.l.b16 %v208
    %v1213 = vunpack.c.h.b16 %v208
    %v1214 = vunpack.c.l.b16 %v209
    %v1215 = vunpack.c.h.b16 %v209
    %v1216 = vunpack.c.l.b16 %v210
    %v1217 = vunpack.c.h.b16 %v210
    %v1218 = vunpack.c.l.b16 %v211
    %v1219 = vunpack.c.h.b16 %v211
    %v1220 = vunpack.c.l.b16 %v212
    %v1221 = vunpack.c.h.b16 %v212
    %v1222 = vunpack.c.l.b16 %v213
    %v1223 = vunpack.c.h.b16 %v213
    %v1224 = vunpack.c.l.b16 %v214
    %v1225 = vunpack.c.h.b16 %v214
    %v1226 = vunpack.c.l.b16 %v215
    %v1227 = vunpack.c.h.b16 %v215
    %v1228 = vunpack.c.l.b16 %v216
    %v1229 = vunpack.c.h.b16 %v216
    %v1230 = vunpack.c.l.b16 %v217
    %v1231 = vunpack.c.h.b16 %v217
    %v1232 = vunpack.c.l.b16 %v218
    %v1233 = vunpack.c.h.b16 %v218
    %v1234 = vunpack.c.l.b16 %v219
    %v1235 = vunpack.c.h.b16 %v219
    %v1236 = vunpack.c.l.b16 %v220
    %v1237 = vunpack.c.h.b16 %v220
    %v1238 = vunpack.c.l.b16 %v221
    %v1239 = vunpack.c.h.b16 %v221
    %v1240 = vunpack.c.l.b16 %v222
    %v1241 = vunpack.c.h.b16 %v222
    %v1242 = vunpack.c.l.b16 %v223
    %v1243 = vunpack.c.h.b16 %v223
    %v1244 = vpack.c.b16 %v1054, %v1052
    %v1245 = vpack.c.b16 %v1055, %v1053
    %v1246 = vpack.c.b16 %v1058, %v1056
    %v1247 = vpack.c.b16 %v1059, %v1057
    %v1248 = vpack.c.b16 %v1062, %v1060
    %v1249 = vpack.c.b16 %v1063, %v1061
    %v1250 = vpack.c.b16 %v1066, %v1064
    %v1251 = vpack.c.b16 %v1067, %v1065
    %v1252 = vpack.c.b16 %v1070, %v1068
    %v1253 = vpack.c.b16 %v1071, %v1069
    %v1254 = vpack.c.b16 %v1074, %v1072
    %v1255 = vpack.c.b16 %v1075, %v1073
    %v1256 = vpack.c.b16 %v1078, %v1076
    %v1257 = vpack.c.b16 %v1079, %v1077
    %v1258 = vpack.c.b16 %v1082, %v1080
    %v1259 = vpack.c.b16 %v1083, %v1081
    %v1260 = vpack.c.b16 %v1086, %v1084
    %v1261 = vpack.c.b16 %v1087, %v1085
    %v1262 = vpack.c.b16 %v1090, %v1088
    %v1263 = vpack.c.b16 %v1091, %v1089
    %v1264 = vpack.c.b16 %v1094, %v1092
    %v1265 = vpack.c.b16 %v1095, %v1093
    %v1266 = vpack.c.b16 %v1098, %v1096
    %v1267 = vpack.c.b16 %v1099, %v1097
    %v1268 = vpack.c.b16 %v1102, %v1100
    %v1269 = vpack.c.b16 %v1103, %v1101
    %v1270 = vpack.c.b16 %v1106, %v1104
    %v1271 = vpack.c.b16 %v1107, %v1105
    %v1272 = vpack.c.b16 %v1110, %v1108
    %v1273 = vpack.c.b16 %v1111, %v1109
    %v1274 = vpack.c.b16 %v1114, %v1112
    %v1275 = vpack.c.b16 %v1115, %v1113
    %v1276 = vpack.c.b16 %v1118, %v1116
    %v1277 = vpack.c.b16 %v1119, %v1117
    %v1278 = vpack.c.b16 %v1122, %v1120
    %v1279 = vpack.c.b16 %v1123, %v1121
    %v1280 = vpack.c.b16 %v1126, %v1124
    %v1281 = vpack.c.b16 %v1127, %v1125
    %v1282 = vpack.c.b16 %v1130, %v1128
    %v1283 = vpack.c.b16 %v1131, %v1129
    %v1284 = vpack.c.b16 %v1134, %v1132
    %v1285 = vpack.c.b16 %v1135, %v1133
    %v1286 = vpack.c.b16 %v1138, %v1136
    %v1287 = vpack.c.b16 %v1139, %v1137
    %v1288 = vpack.c.b16 %v1142, %v1140
    %v1289 = vpack.c.b16 %v1143, %v1141
    %v1290 = vpack.c.b16 %v1146, %v1144
    %v1291 = vpack.c.b16 %v1147, %v1145
    %v1292 = vpack.c.b16 %v1150, %v1148
    %v1293 = vpack.c.b16 %v1151, %v1149
    %v1294 = vpack.c.b16 %v1154, %v1152
    %v1295 = vpack.c.b16 %v1155, %v1153
    %v1296 = vpack.c.b16 %v1158, %v1156
    %v1297 = vpack.c.b16 %v1159, %v1157
    %v1298 = vpack.c.b16 %v1162, %v1160
    %v1299 = vpack.c.b16 %v1163, %v1161
    %v1300 = vpack.c.b16 %v1166, %v1164
    %v1301 = vpack.c.b16 %v1167, %v1165
    %v1302 = vpack.c.b16 %v1170, %v1168
    %v1303 = vpack.c.b16 %v1171, %v1169
    %v1304 = vpack.c.b16 %v1174, %v1172
    %v1305 = vpack.c.b16 %v1175, %v1173
    %v1306 = vpack.c.b16 %v1178, %v1176
    %v1307 = vpack.c.b16 %v1179, %v1177
    %v1308 = vpack.c.b16 %v1182, %v1180
    %v1309 = vpack.c.b16 %v1183, %v1181
    %v1310 = vpack.c.b16 %v1186, %v1184
    %v1311 = vpack.c.b16 %v1187, %v1185
    %v1312 = vpack.c.b16 %v1190, %v1188
    %v1313 = vpack.c.b16 %v1191, %v1189
    %v1314 = vpack.c.b16 %v1194, %v1192
    %v1315 = vpack.c.b16 %v1195, %v1193
    %v1316 = vpack.c.b16 %v1198, %v1196
    %v1317 = vpack.c.b16 %v1199, %v1197
    %v1318 = vpack.c.b16 %v1202, %v1200
    %v1319 = vpack.c.b16 %v1203, %v1201
    %v1320 = vpack.c.b16 %v1206, %v1204
    %v1321 = vpack.c.b16 %v1207, %v1205
    %v1322 = vpack.c.b16 %v1210, %v1208
    %v1323 = vpack.c.b16 %v1211, %v1209
    %v1324 = vpack.c.b16 %v1214, %v1212
    %v1325 = vpack.c.b16 %v1215, %v1213
    %v1326 = vpack.c.b16 %v1218, %v1216
    %v1327 = vpack.c.b16 %v1219, %v1217
    %v1328 = vpack.c.b16 %v1222, %v1220
    %v1329 = vpack.c.b16 %v1223, %v1221
    %v1330 = vpack.c.b16 %v1226, %v1224
    %v1331 = vpack.c.b16 %v1227, %v1225
    %v1332 = vpack.c.b16 %v1230, %v1228
    %v1333 = vpack.c.b16 %v1231, %v1229
    %v1334 = vpack.c.b16 %v1234, %v1232
    %v1335 = vpack.c.b16 %v1235, %v1233
    %v1336 = vpack.c.b16 %v1238, %v1236
    %v1337 = vpack.c.b16 %v1239, %v1237
    %v1338 = vpack.c.b16 %v1242, %v1240
    %v1339 = vpack.c.b16 %v1243, %v1241
    %1436 = vmatpush.bf16.msra.mxu0 %v1258
    %1437 = vmatpush.bf16.msra.mxu0 %v1256
    %1438 = vmatpush.bf16.msra.mxu0 %v1254
    %1439 = vmatpush.bf16.msra.mxu0 %v1252
    %1440 = vmatpush.bf16.msra.mxu0 %v1250
    %1441 = vmatpush.bf16.msra.mxu0 %v1248
    %1442 = vmatpush.bf16.msra.mxu0 %v1246
    %1443 = vmatpush.bf16.msra.mxu0 %v1244
    %1444 = vmatmul.bf16.gmra.mxu0 %v110
    %v1445 = vpop.f32.mrf.mxu0
    %v1446 = vadd.f32 %v875, %v1445
    %v1447 = vpop.f32.mrf.mxu0
    %1448 = vdwg.mxu0
    %1449 = vmatpush.bf16.msra.mxu0 %v1274
    %1450 = vmatpush.bf16.msra.mxu0 %v1272
    %1451 = vmatpush.bf16.msra.mxu0 %v1270
    %1452 = vmatpush.bf16.msra.mxu0 %v1268
    %1453 = vmatpush.bf16.msra.mxu0 %v1266
    %1454 = vmatpush.bf16.msra.mxu0 %v1264
    %1455 = vmatpush.bf16.msra.mxu0 %v1262
    %1456 = vmatpush.bf16.msra.mxu0 %v1260
    %1457 = vmatmul.bf16.gmra.mxu0 %v111
    %v1458 = vpop.f32.mrf.mxu0
    %v1459 = vadd.f32 %v1446, %v1458
    %v1460 = vpop.f32.mrf.mxu0
    %1461 = vdwg.mxu0
    %1462 = vmatpush.bf16.msra.mxu0 %v1290
    %1463 = vmatpush.bf16.msra.mxu0 %v1288
    %1464 = vmatpush.bf16.msra.mxu0 %v1286
    %1465 = vmatpush.bf16.msra.mxu0 %v1284
    %1466 = vmatpush.bf16.msra.mxu0 %v1282
    %1467 = vmatpush.bf16.msra.mxu0 %v1280
    %1468 = vmatpush.bf16.msra.mxu0 %v1278
    %1469 = vmatpush.bf16.msra.mxu0 %v1276
    %1470 = vmatmul.bf16.gmra.mxu0 %v112
    %v1471 = vpop.f32.mrf.mxu0
    %v1472 = vadd.f32 %v1459, %v1471
    %v1473 = vpop.f32.mrf.mxu0
    %1474 = vdwg.mxu0
    %1475 = vmatpush.bf16.msra.mxu0 %v1306
    %1476 = vmatpush.bf16.msra.mxu0 %v1304
    %1477 = vmatpush.bf16.msra.mxu0 %v1302
    %1478 = vmatpush.bf16.msra.mxu0 %v1300
    %1479 = vmatpush.bf16.msra.mxu0 %v1298
    %1480 = vmatpush.bf16.msra.mxu0 %v1296
    %1481 = vmatpush.bf16.msra.mxu0 %v1294
    %1482 = vmatpush.bf16.msra.mxu0 %v1292
    %1483 = vmatmul.bf16.gmra.mxu0 %v113
    %v1484 = vpop.f32.mrf.mxu0
    %v1485 = vadd.f32 %v1472, %v1484
    %v1486 = vpop.f32.mrf.mxu0
    %1487 = vdwg.mxu0
    %1488 = vmatpush.bf16.msra.mxu0 %v1322
    %1489 = vmatpush.bf16.msra.mxu0 %v1320
    %1490 = vmatpush.bf16.msra.mxu0 %v1318
    %1491 = vmatpush.bf16.msra.mxu0 %v1316
    %1492 = vmatpush.bf16.msra.mxu0 %v1314
    %1493 = vmatpush.bf16.msra.mxu0 %v1312
    %1494 = vmatpush.bf16.msra.mxu0 %v1310
    %1495 = vmatpush.bf16.msra.mxu0 %v1308
    %1496 = vmatmul.bf16.gmra.mxu0 %v114
    %v1497 = vpop.f32.mrf.mxu0
    %v1498 = vadd.f32 %v1485, %v1497
    %v1499 = vpop.f32.mrf.mxu0
    %1500 = vdwg.mxu0
    %1501 = vmatpush.bf16.msra.mxu0 %v1338
    %1502 = vmatpush.bf16.msra.mxu0 %v1336
    %1503 = vmatpush.bf16.msra.mxu0 %v1334
    %1504 = vmatpush.bf16.msra.mxu0 %v1332
    %1505 = vmatpush.bf16.msra.mxu0 %v1330
    %1506 = vmatpush.bf16.msra.mxu0 %v1328
    %1507 = vmatpush.bf16.msra.mxu0 %v1326
    %1508 = vmatpush.bf16.msra.mxu0 %v1324
    %1509 = vmatmul.bf16.gmra.mxu0 %v115
    %v1510 = vpop.f32.mrf.mxu0
    %v1511 = vadd.f32 %v1498, %v1510
    %v1512 = vpop.f32.mrf.mxu0
    %1513 = vdwg.mxu0
    %1514 = vmatpush.bf16.msra.mxu0 %v1259
    %1515 = vmatpush.bf16.msra.mxu0 %v1257
    %1516 = vmatpush.bf16.msra.mxu0 %v1255
    %1517 = vmatpush.bf16.msra.mxu0 %v1253
    %1518 = vmatpush.bf16.msra.mxu0 %v1251
    %1519 = vmatpush.bf16.msra.mxu0 %v1249
    %1520 = vmatpush.bf16.msra.mxu0 %v1247
    %1521 = vmatpush.bf16.msra.mxu0 %v1245
    %1522 = vmatmul.bf16.gmra.mxu0 %v110
    %v1523 = vpop.f32.mrf.mxu0
    %v1524 = vadd.f32 %v953, %v1523
    %v1525 = vpop.f32.mrf.mxu0
    %1526 = vdwg.mxu0
    %1527 = vmatpush.bf16.msra.mxu0 %v1275
    %1528 = vmatpush.bf16.msra.mxu0 %v1273
    %1529 = vmatpush.bf16.msra.mxu0 %v1271
    %1530 = vmatpush.bf16.msra.mxu0 %v1269
    %1531 = vmatpush.bf16.msra.mxu0 %v1267
    %1532 = vmatpush.bf16.msra.mxu0 %v1265
    %1533 = vmatpush.bf16.msra.mxu0 %v1263
    %1534 = vmatpush.bf16.msra.mxu0 %v1261
    %1535 = vmatmul.bf16.gmra.mxu0 %v111
    %v1536 = vpop.f32.mrf.mxu0
    %v1537 = vadd.f32 %v1524, %v1536
    %v1538 = vpop.f32.mrf.mxu0
    %1539 = vdwg.mxu0
    %1540 = vmatpush.bf16.msra.mxu0 %v1291
    %1541 = vmatpush.bf16.msra.mxu0 %v1289
    %1542 = vmatpush.bf16.msra.mxu0 %v1287
    %1543 = vmatpush.bf16.msra.mxu0 %v1285
    %1544 = vmatpush.bf16.msra.mxu0 %v1283
    %1545 = vmatpush.bf16.msra.mxu0 %v1281
    %1546 = vmatpush.bf16.msra.mxu0 %v1279
    %1547 = vmatpush.bf16.msra.mxu0 %v1277
    %1548 = vmatmul.bf16.gmra.mxu0 %v112
    %v1549 = vpop.f32.mrf.mxu0
    %v1550 = vadd.f32 %v1537, %v1549
    %v1551 = vpop.f32.mrf.mxu0
    %1552 = vdwg.mxu0
    %1553 = vmatpush.bf16.msra.mxu0 %v1307
    %1554 = vmatpush.bf16.msra.mxu0 %v1305
    %1555 = vmatpush.bf16.msra.mxu0 %v1303
    %1556 = vmatpush.bf16.msra.mxu0 %v1301
    %1557 = vmatpush.bf16.msra.mxu0 %v1299
    %1558 = vmatpush.bf16.msra.mxu0 %v1297
    %1559 = vmatpush.bf16.msra.mxu0 %v1295
    %1560 = vmatpush.bf16.msra.mxu0 %v1293
    %1561 = vmatmul.bf16.gmra.mxu0 %v113
    %v1562 = vpop.f32.mrf.mxu0
    %v1563 = vadd.f32 %v1550, %v1562
    %v1564 = vpop.f32.mrf.mxu0
    %1565 = vdwg.mxu0
    %1566 = vmatpush.bf16.msra.mxu0 %v1323
    %1567 = vmatpush.bf16.msra.mxu0 %v1321
    %1568 = vmatpush.bf16.msra.mxu0 %v1319
    %1569 = vmatpush.bf16.msra.mxu0 %v1317
    %1570 = vmatpush.bf16.msra.mxu0 %v1315
    %1571 = vmatpush.bf16.msra.mxu0 %v1313
    %1572 = vmatpush.bf16.msra.mxu0 %v1311
    %1573 = vmatpush.bf16.msra.mxu0 %v1309
    %1574 = vmatmul.bf16.gmra.mxu0 %v114
    %v1575 = vpop.f32.mrf.mxu0
    %v1576 = vadd.f32 %v1563, %v1575
    %v1577 = vpop.f32.mrf.mxu0
    %1578 = vdwg.mxu0
    %1579 = vmatpush.bf16.msra.mxu0 %v1339
    %1580 = vmatpush.bf16.msra.mxu0 %v1337
    %1581 = vmatpush.bf16.msra.mxu0 %v1335
    %1582 = vmatpush.bf16.msra.mxu0 %v1333
    %1583 = vmatpush.bf16.msra.mxu0 %v1331
    %1584 = vmatpush.bf16.msra.mxu0 %v1329
    %1585 = vmatpush.bf16.msra.mxu0 %v1327
    %1586 = vmatpush.bf16.msra.mxu0 %v1325
    %1587 = vmatmul.bf16.gmra.mxu0 %v115
    %v1588 = vpop.f32.mrf.mxu0
    %v1589 = vadd.f32 %v1576, %v1588
    %v1590 = vpop.f32.mrf.mxu0
    %1591 = vdwg.mxu0
    %v1592 = vld [vmem:[%s4] sm:$0x3]
    %v1594 = vperm.slane %v1592, 0
    %v1595 = vperm.slane %v1592, 1
    %v1598 = vadd.f32 %v1511, %v1594
    %v1599 = vadd.f32 %v1589, %v1595
    %v1600 = vmax.f32 %v1598, 0.0
    %v1601 = vmax.f32 %v1599, 0.0
    %v1602 = vld [vmem:[%s5] sm:$0x3]
    %v1603 = vld [vmem:[%s6] sm:$0x3]
    %v1604 = vadd.f32 %v1600, %v1601
    %1605 = vadd.xlane.f32.xlu0 %v1604
    %v1606 = vpop.xlane.xlu0 %1605
    %v1607 = vmul.f32 %v1606, 0.00390625
    %v1608 = vmul.f32 %v1600, %v1600
    %v1609 = vmul.f32 %v1601, %v1601
    %v1610 = vadd.f32 %v1608, %v1609
    %1611 = vadd.xlane.f32.xlu0 %v1610
    %v1612 = vpop.xlane.xlu0 %1611
    %v1613 = vmul.f32 %v1612, 0.00390625
    %v1614 = vmul.f32 %v1607, %v1607
    %v1615 = vsub.f32 %v1613, %v1614
    %v1616 = vmax.f32 %v1615, 0.0
    %v1617 = vadd.f32 %v1616, 1e-05
    %v1618 = vrsqrt.pop %v1617
    %v1619 = vmul.f32 %v1618, %v1617
    %v1620 = vmul.f32 %v1619, %v1618
    %v1621 = vmul.f32 0.5, %v1620
    %v1622 = vsub.f32 1.5, %v1621
    %v1623 = vmul.f32 %v1618, %v1622
    %vm1624 = vweird.f32 %v1617
    %vm1625 = vweird.f32 %v1618
    %vm1626 = vmor %vm1624, %vm1625
    %v1627 = vsel %vm1626, %v1618, %v1623
    %v1629 = vperm.slane %v1602, 0
    %v1630 = vperm.slane %v1602, 1
    %v1633 = vmul.f32 %v1627, %v1629
    %v1634 = vmul.f32 %v1627, %v1630
    %v1635 = vsub.f32 %v1600, %v1607
    %v1636 = vsub.f32 %v1601, %v1607
    %v1637 = vmul.f32 %v1635, %v1633
    %v1638 = vmul.f32 %v1636, %v1634
    %v1640 = vperm.slane %v1603, 0
    %v1641 = vperm.slane %v1603, 1
    %v1644 = vadd.f32 %v1637, %v1640
    %v1645 = vadd.f32 %v1638, %v1641
    %v1646 = vpack.c.bf16 %v1644, %v1644
    %v1647 = vpack.c.bf16 %v1645, %v1645
    %v1648 = vld [vmem:[#allocation6] sm:$0xf]
    %v1649 = vld [vmem:[#allocation6 + $0x4] sm:$0xf]
    %v1650 = vld [vmem:[#allocation6 + $0x8] sm:$0xf]
    %v1651 = vld [vmem:[#allocation6 + $0xc] sm:$0xf]
    %v1652 = vld [vmem:[#allocation6 + $0x10] sm:$0xf]
    %v1653 = vld [vmem:[#allocation6 + $0x14] sm:$0xf]
    %v1654 = vld [vmem:[#allocation6 + $0x18] sm:$0xf]
    %v1655 = vld [vmem:[#allocation6 + $0x1c] sm:$0xf]
    %v1656 = vld [vmem:[#allocation6 + $0x20] sm:$0xf]
    %v1657 = vld [vmem:[#allocation6 + $0x24] sm:$0xf]
    %v1658 = vld [vmem:[#allocation6 + $0x28] sm:$0xf]
    %v1659 = vld [vmem:[#allocation6 + $0x2c] sm:$0xf]
    %v1660 = vld [vmem:[#allocation6 + $0x30] sm:$0xf]
    %v1661 = vld [vmem:[#allocation6 + $0x34] sm:$0xf]
    %v1662 = vld [vmem:[#allocation6 + $0x38] sm:$0xf]
    %v1663 = vld [vmem:[#allocation6 + $0x3c] sm:$0xf]
    %v1664 = vld [vmem:[#allocation6 + $0x40] sm:$0xf]
    %v1665 = vld [vmem:[#allocation6 + $0x44] sm:$0xf]
    %v1666 = vld [vmem:[#allocation6 + $0x48] sm:$0xf]
    %v1667 = vld [vmem:[#allocation6 + $0x4c] sm:$0xf]
    %v1668 = vld [vmem:[#allocation6 + $0x50] sm:$0xf]
    %v1669 = vld [vmem:[#allocation6 + $0x54] sm:$0xf]
    %v1670 = vld [vmem:[#allocation6 + $0x58] sm:$0xf]
    %v1671 = vld [vmem:[#allocation6 + $0x5c] sm:$0xf]
    %v1672 = vld [vmem:[#allocation6 + $0x60] sm:$0xf]
    %v1673 = vld [vmem:[#allocation6 + $0x64] sm:$0xf]
    %v1674 = vld [vmem:[#allocation6 + $0x68] sm:$0xf]
    %v1675 = vld [vmem:[#allocation6 + $0x6c] sm:$0xf]
    %v1676 = vld [vmem:[#allocation6 + $0x70] sm:$0xf]
    %v1677 = vld [vmem:[#allocation6 + $0x74] sm:$0xf]
    %v1678 = vld [vmem:[#allocation6 + $0x78] sm:$0xf]
    %v1679 = vld [vmem:[#allocation6 + $0x7c] sm:$0xf]
    %v1680 = vld [vmem:[%s8] sm:$0x1]
    %v1682 = vperm.slane %v1680, 0
    %v1716 = vunpack.c.l.b16 %v1648
    %v1717 = vunpack.c.l.b16 %v1649
    %v1718 = vunpack.c.l.b16 %v1650
    %v1719 = vunpack.c.l.b16 %v1651
    %v1720 = vunpack.c.l.b16 %v1652
    %v1721 = vunpack.c.l.b16 %v1653
    %v1722 = vunpack.c.l.b16 %v1654
    %v1723 = vunpack.c.l.b16 %v1655
    %v1724 = vunpack.c.l.b16 %v1656
    %v1725 = vunpack.c.l.b16 %v1657
    %v1726 = vunpack.c.l.b16 %v1658
    %v1727 = vunpack.c.l.b16 %v1659
    %v1728 = vunpack.c.l.b16 %v1660
    %v1729 = vunpack.c.l.b16 %v1661
    %v1730 = vunpack.c.l.b16 %v1662
    %v1731 = vunpack.c.l.b16 %v1663
    %v1732 = vunpack.c.l.b16 %v1664
    %v1733 = vunpack.c.l.b16 %v1665
    %v1734 = vunpack.c.l.b16 %v1666
    %v1735 = vunpack.c.l.b16 %v1667
    %v1736 = vunpack.c.l.b16 %v1668
    %v1737 = vunpack.c.l.b16 %v1669
    %v1738 = vunpack.c.l.b16 %v1670
    %v1739 = vunpack.c.l.b16 %v1671
    %v1740 = vunpack.c.l.b16 %v1672
    %v1741 = vunpack.c.l.b16 %v1673
    %v1742 = vunpack.c.l.b16 %v1674
    %v1743 = vunpack.c.l.b16 %v1675
    %v1744 = vunpack.c.l.b16 %v1676
    %v1745 = vunpack.c.l.b16 %v1677
    %v1746 = vunpack.c.l.b16 %v1678
    %v1747 = vunpack.c.l.b16 %v1679
    %v1748 = vpack.c.b16 %v1717, %v1716
    %v1749 = vpack.c.b16 %v1719, %v1718
    %v1750 = vpack.c.b16 %v1721, %v1720
    %v1751 = vpack.c.b16 %v1723, %v1722
    %v1752 = vpack.c.b16 %v1725, %v1724
    %v1753 = vpack.c.b16 %v1727, %v1726
    %v1754 = vpack.c.b16 %v1729, %v1728
    %v1755 = vpack.c.b16 %v1731, %v1730
    %v1756 = vpack.c.b16 %v1733, %v1732
    %v1757 = vpack.c.b16 %v1735, %v1734
    %v1758 = vpack.c.b16 %v1737, %v1736
    %v1759 = vpack.c.b16 %v1739, %v1738
    %v1760 = vpack.c.b16 %v1741, %v1740
    %v1761 = vpack.c.b16 %v1743, %v1742
    %v1762 = vpack.c.b16 %v1745, %v1744
    %v1763 = vpack.c.b16 %v1747, %v1746
    %1780 = vmatpush.bf16.msra.mxu0 %v1755
    %1781 = vmatpush.bf16.msra.mxu0 %v1754
    %1782 = vmatpush.bf16.msra.mxu0 %v1753
    %1783 = vmatpush.bf16.msra.mxu0 %v1752
    %1784 = vmatpush.bf16.msra.mxu0 %v1751
    %1785 = vmatpush.bf16.msra.mxu0 %v1750
    %1786 = vmatpush.bf16.msra.mxu0 %v1749
    %1787 = vmatpush.bf16.msra.mxu0 %v1748
    %1788 = vmatmul.bf16.gmra.mxu0 %v1646
    %v1789 = vpop.f32.mrf.mxu0
    %v1790 = vadd.f32 %v1682, %v1789
    %v1791 = vpop.f32.mrf.mxu0
    %1792 = vdwg.mxu0
    %1793 = vmatpush.bf16.msra.mxu0 %v1763
    %1794 = vmatpush.bf16.msra.mxu0 %v1762
    %1795 = vmatpush.bf16.msra.mxu0 %v1761
    %1796 = vmatpush.bf16.msra.mxu0 %v1760
    %1797 = vmatpush.bf16.msra.mxu0 %v1759
    %1798 = vmatpush.bf16.msra.mxu0 %v1758
    %1799 = vmatpush.bf16.msra.mxu0 %v1757
    %1800 = vmatpush.bf16.msra.mxu0 %v1756
    %1801 = vmatmul.bf16.gmra.mxu0 %v1647
    %v1802 = vpop.f32.mrf.mxu0
    %v1803 = vadd.f32 %v1790, %v1802
    %v1804 = vpop.f32.mrf.mxu0
    %1805 = vdwg.mxu0
    %v1806 = vmax.f32 %v1803, 0.0
    %v1807 = vld [vmem:[%s9] sm:$0x1]
    %v1808 = vld [vmem:[%s10] sm:$0x1]
    %1809 = vadd.xlane.f32.xlu0 %v1806
    %v1810 = vpop.xlane.xlu0 %1809
    %v1811 = vmul.f32 %v1810, 0.0078125
    %v1812 = vmul.f32 %v1806, %v1806
    %1813 = vadd.xlane.f32.xlu0 %v1812
    %v1814 = vpop.xlane.xlu0 %1813
    %v1815 = vmul.f32 %v1814, 0.0078125
    %v1816 = vmul.f32 %v1811, %v1811
    %v1817 = vsub.f32 %v1815, %v1816
    %v1818 = vmax.f32 %v1817, 0.0
    %v1819 = vadd.f32 %v1818, 1e-05
    %v1820 = vrsqrt.pop %v1819
    %v1821 = vmul.f32 %v1820, %v1819
    %v1822 = vmul.f32 %v1821, %v1820
    %v1823 = vmul.f32 0.5, %v1822
    %v1824 = vsub.f32 1.5, %v1823
    %v1825 = vmul.f32 %v1820, %v1824
    %vm1826 = vweird.f32 %v1819
    %vm1827 = vweird.f32 %v1820
    %vm1828 = vmor %vm1826, %vm1827
    %v1829 = vsel %vm1828, %v1820, %v1825
    %v1831 = vperm.slane %v1807, 0
    %v1833 = vmul.f32 %v1829, %v1831
    %v1834 = vsub.f32 %v1806, %v1811
    %v1835 = vmul.f32 %v1834, %v1833
    %v1837 = vperm.slane %v1808, 0
    %v1839 = vadd.f32 %v1835, %v1837
    %v1840 = vpack.c.bf16 %v1839, %v1839
    %v1841 = vld [vmem:[%s11] sm:$0xf]
    %v1842 = vld [vmem:[%s11 + $0x4] sm:$0xf]
    %v1843 = vld [vmem:[%s11 + $0x8] sm:$0xf]
    %v1844 = vld [vmem:[%s11 + $0xc] sm:$0xf]
    %v1845 = vld [vmem:[%s11 + $0x10] sm:$0xf]
    %v1846 = vld [vmem:[%s11 + $0x14] sm:$0xf]
    %v1847 = vld [vmem:[%s11 + $0x18] sm:$0xf]
    %v1848 = vld [vmem:[%s11 + $0x1c] sm:$0xf]
    %v1849 = vld [vmem:[%s11 + $0x20] sm:$0xf]
    %v1850 = vld [vmem:[%s11 + $0x24] sm:$0xf]
    %v1851 = vld [vmem:[%s11 + $0x28] sm:$0xf]
    %v1852 = vld [vmem:[%s11 + $0x2c] sm:$0xf]
    %v1853 = vld [vmem:[%s11 + $0x30] sm:$0xf]
    %v1854 = vld [vmem:[%s11 + $0x34] sm:$0xf]
    %v1855 = vld [vmem:[%s11 + $0x38] sm:$0xf]
    %v1856 = vld [vmem:[%s11 + $0x3c] sm:$0xf]
    %v1857 = vld [vmem:[%s12] sm:$0x1]
    %v1859 = vperm.slane %v1857, 0
    %v1877 = vunpack.c.l.b16 %v1841
    %v1878 = vunpack.c.l.b16 %v1842
    %v1879 = vunpack.c.l.b16 %v1843
    %v1880 = vunpack.c.l.b16 %v1844
    %v1881 = vunpack.c.l.b16 %v1845
    %v1882 = vunpack.c.l.b16 %v1846
    %v1883 = vunpack.c.l.b16 %v1847
    %v1884 = vunpack.c.l.b16 %v1848
    %v1885 = vunpack.c.l.b16 %v1849
    %v1886 = vunpack.c.l.b16 %v1850
    %v1887 = vunpack.c.l.b16 %v1851
    %v1888 = vunpack.c.l.b16 %v1852
    %v1889 = vunpack.c.l.b16 %v1853
    %v1890 = vunpack.c.l.b16 %v1854
    %v1891 = vunpack.c.l.b16 %v1855
    %v1892 = vunpack.c.l.b16 %v1856
    %v1893 = vpack.c.b16 %v1878, %v1877
    %v1894 = vpack.c.b16 %v1880, %v1879
    %v1895 = vpack.c.b16 %v1882, %v1881
    %v1896 = vpack.c.b16 %v1884, %v1883
    %v1897 = vpack.c.b16 %v1886, %v1885
    %v1898 = vpack.c.b16 %v1888, %v1887
    %v1899 = vpack.c.b16 %v1890, %v1889
    %v1900 = vpack.c.b16 %v1892, %v1891
    %1909 = vmatpush.bf16.msra.mxu0 %v1900
    %1910 = vmatpush.bf16.msra.mxu0 %v1899
    %1911 = vmatpush.bf16.msra.mxu0 %v1898
    %1912 = vmatpush.bf16.msra.mxu0 %v1897
    %1913 = vmatpush.bf16.msra.mxu0 %v1896
    %1914 = vmatpush.bf16.msra.mxu0 %v1895
    %1915 = vmatpush.bf16.msra.mxu0 %v1894
    %1916 = vmatpush.bf16.msra.mxu0 %v1893
    %1917 = vmatmul.bf16.gmra.mxu0 %v1840
    %v1918 = vpop.f32.mrf.mxu0
    %v1919 = vadd.f32 %v1859, %v1918
    %v1920 = vpop.f32.mrf.mxu0
    %1921 = vdwg.mxu0
    %v1922 = vmax.f32 %v1919, 0.0
    %v1923 = vld [vmem:[%s13] sm:$0x1]
    %v1924 = vld [vmem:[%s14] sm:$0x1]
    %vm1925 = vcmask 261120
    %v1926 = vsel %vm1925, %v1922, 0.0
    %1927 = vadd.xlane.f32.xlu0 %v1926
    %v1928 = vpop.xlane.xlu0 %1927
    %v1929 = vmul.f32 %v1928, 0.03125
    %v1930 = vmul.f32 %v1922, %v1922
    %v1931 = vsel %vm1925, %v1930, 0.0
    %1932 = vadd.xlane.f32.xlu0 %v1931
    %v1933 = vpop.xlane.xlu0 %1932
    %v1934 = vmul.f32 %v1933, 0.03125
    %v1935 = vmul.f32 %v1929, %v1929
    %v1936 = vsub.f32 %v1934, %v1935
    %v1937 = vmax.f32 %v1936, 0.0
    %v1938 = vadd.f32 %v1937, 1e-05
    %v1939 = vrsqrt.pop %v1938
    %v1940 = vmul.f32 %v1939, %v1938
    %v1941 = vmul.f32 %v1940, %v1939
    %v1942 = vmul.f32 0.5, %v1941
    %v1943 = vsub.f32 1.5, %v1942
    %v1944 = vmul.f32 %v1939, %v1943
    %vm1945 = vweird.f32 %v1938
    %vm1946 = vweird.f32 %v1939
    %vm1947 = vmor %vm1945, %vm1946
    %v1948 = vsel %vm1947, %v1939, %v1944
    %v1950 = vperm.slane %v1923, 0
    %v1952 = vmul.f32 %v1948, %v1950
    %v1953 = vsub.f32 %v1922, %v1929
    %v1954 = vmul.f32 %v1953, %v1952
    %v1956 = vperm.slane %v1924, 0
    %v1958 = vadd.f32 %v1954, %v1956
    %v1959 = vpack.c.bf16 %v1958, %v1958
    %v1960 = vld [vmem:[%s15] sm:$0xf]
    %v1961 = vld [vmem:[%s15 + $0x4] sm:$0xf]
    %v1962 = vld [vmem:[%s15 + $0x8] sm:$0xf]
    %v1963 = vld [vmem:[%s15 + $0xc] sm:$0xf]
    %v1964 = vld [vmem:[%s16] sm:$0x1]
    %v1966 = vperm.slane %v1964, 0
    %v1972 = vunpack.c.l.b16 %v1960
    %v1973 = vunpack.c.l.b16 %v1961
    %v1974 = vunpack.c.l.b16 %v1962
    %v1975 = vunpack.c.l.b16 %v1963
    %v1976 = vpack.c.b16 %v1973, %v1972
    %v1977 = vpack.c.b16 %v1975, %v1974
    %v1981 = vsel %vm1925, %v1959, 0
    %1983 = vmatpush.bf16.msra.mxu0 0
    %1984 = vmatpush.bf16.msra.mxu0 0
    %1985 = vmatpush.bf16.msra.mxu0 0
    %1986 = vmatpush.bf16.msra.mxu0 0
    %1987 = vmatpush.bf16.msra.mxu0 0
    %1988 = vmatpush.bf16.msra.mxu0 0
    %1989 = vmatpush.bf16.msra.mxu0 %v1977
    %1990 = vmatpush.bf16.msra.mxu0 %v1976
    %1991 = vmatmul.bf16.gmra.mxu0 %v1981
    %v1992 = vpop.f32.mrf.mxu0
    %v1993 = vadd.f32 %v1966, %v1992
    %v1994 = vpop.f32.mrf.mxu0
    %1995 = vdwg.mxu0
    %v1996 = vxor.u32 %v1993, 2147483648
    %v1997 = vmul.f32 %v1996, 1.442695
    %v1998 = vpow.pop %v1997
    %v1999 = vadd.f32 %v1998, 1.0
    %v2000 = vrcp.pop %v1999
    %v2001 = vmul.f32 %v1999, %v2000
    %v2002 = vsub.f32 1.0, %v2001
    %v2003 = vmul.f32 %v2000, %v2002
    %v2004 = vadd.f32 %v2000, %v2003
    %vm2005 = vweird.f32 %v1999
    %vm2006 = vweird.f32 %v2000
    %vm2007 = vmor %vm2005, %vm2006
    %v2008 = vsel %vm2007, %v2000, %v2004
    %v2009 = vand.u32 2147483647, %v1999
    %vm2010 = vcmp.eq.f32.partialorder %v2009, 8.507059e+37
    %v2011 = vand.u32 %v1999, 2147483648
    %v2012 = vor.u32 1.1754944e-38, %v2011
    %v2013 = vsel %vm2010, %v2012, %v2008
    %v2014 = vmul.f32 1.0, %v2013
    %vm2015 = vcmask 15360
    %2016 = vst.msk [vmem:[%s17] sm:$0xff] %vm2015, %v2014
    // Predicated region
    $region82: #{tpu_custom_call.1} parent=1 // pred_check
      _
    $region83: #{tpu_custom_call.1} parent=1 // pred_check_branch
      %2018 = sbr.rel (0) target = $region85
    $region84: #{tpu_custom_call.1} parent=1 // pred_region
      _
    $region85: #{tpu_custom_call.1} parent=1 // pred_fallthru
      _
    // Predicated region
    $region86: #{tpu_custom_call.1} parent=1 // pred_check
      _
    $region87: #{tpu_custom_call.1} parent=1 // pred_check_branch
      %2020 = sbr.rel (0) target = $region89
    $region88: #{tpu_custom_call.1} parent=1 // pred_region
      _
    $region89: #{tpu_custom_call.1} parent=1 // pred_fallthru
      _
    %2021 = vsyncpa [#allocation3], 1
    %2022 = vsyncpa [#allocation5], 1

</llo_original>
